<compile_context>
chip_gen: v7x
topology: tpu7x:2x2x1
jax: 0.10.0
libtpu: 0.0.40
codegen_flags: <defaults>
</compile_context>

<pallas_src>
import functools
import math

import jax
import jax.numpy as jnp
from jax import lax
from jax.experimental import pallas as pl
from jax.experimental.pallas import tpu as pltpu


# Contract x's last dim against W's last dim  <=>  x @ W.T  with W in PyTorch (out, in) layout.
_DN_T = (((1,), (1,)), ((), ()))


def _mm_t(x, w):
    """(rows, in) f32  x  (out, in) bf16/f32  ->  (rows, out) f32 on the MXU."""
    return lax.dot_general(x.astype(w.dtype), w, _DN_T,
                           preferred_element_type=jnp.float32)


def _layernorm(x, gamma, beta, eps=1e-5):
    mu = jnp.mean(x, axis=-1, keepdims=True)
    var = jnp.mean((x - mu) ** 2, axis=-1, keepdims=True)
    return (x - mu) * lax.rsqrt(var + eps) * gamma + beta


def _vmem_limit_bytes():
    """Per-generation scoped-VMEM budget (v5e/v6e: 128 MiB, v7x: 64 MiB physical)."""
    try:
        cap = int(pltpu.get_tpu_info().vmem_capacity_bytes)
    except Exception:  # conservative fallback valid on every generation
        cap = 64 * 1024 * 1024
    return int(min(cap - (16 << 20), 100 << 20))


def _encoder_s1_kernel(x_ref, vw_ref, vb_ref, ow_ref, ob_ref,
                       w1_ref, b1_ref, w2_ref, b2_ref,
                       g1_ref, be1_ref, g2_ref, be2_ref,
                       cw_ref, cb_ref, out_ref, x_sc):
    """One grid step == one encoder layer; S == 1 fast path (attention == V)."""
    l = pl.program_id(0)

    @pl.when(l == 0)
    def _():
        x_sc[...] = x_ref[...].astype(jnp.float32)

    x = x_sc[...]                                           # (B*S, D) f32, persistent

    # --- self-attention: softmax over a single key is identity => out = V ---
    v = _mm_t(x, vw_ref[...]) + vb_ref[...]                 # (B*S, D)
    attn = _mm_t(v, ow_ref[...]) + ob_ref[...]
    x = _layernorm(x + attn, g1_ref[...], be1_ref[...])

    # --- ReLU feed-forward ---
    h1 = jnp.maximum(_mm_t(x, w1_ref[...]) + b1_ref[...], 0.0)
    ff = _mm_t(h1, w2_ref[...]) + b2_ref[...]
    x = _layernorm(x + ff, g2_ref[...], be2_ref[...])

    x_sc[...] = x

    @pl.when(l == pl.num_programs(0) - 1)
    def _():
        logits = _mm_t(x, cw_ref[...]) + cb_ref[...]        # (B*S, C_pad) lane-dense
        out_ref[...] = logits.astype(out_ref.dtype)


def _encoder_general_kernel(x_ref, inw_ref, inb_ref, ow_ref, ob_ref,
                            w1_ref, b1_ref, w2_ref, b2_ref,
                            g1_ref, be1_ref, g2_ref, be2_ref,
                            cw_ref, cb_ref, out_ref, x_sc, *, nhead, B, S):
    """General-S path (real softmax attention, batched over heads, no Python b/h loops)."""
    D = x_sc.shape[-1]
    hd = D // nhead
    scale = 1.0 / math.sqrt(hd)
    l = pl.program_id(0)

    @pl.when(l == 0)
    def _():
        x_sc[...] = x_ref[...].astype(jnp.float32)

    x = x_sc[...]                                           # (B*S, D)

    qkv = _mm_t(x, inw_ref[...]) + inb_ref[...]             # (B*S, 3D)
    qkv = qkv.reshape(B, S, 3, nhead, hd)
    q = qkv[:, :, 0] * scale
    k = qkv[:, :, 1]
    v = qkv[:, :, 2]
    s = jnp.einsum("bqhd,bkhd->bhqk", q, k, preferred_element_type=jnp.float32)
    s = s - jnp.max(s, axis=-1, keepdims=True)
    e = jnp.exp(s)
    p = e / jnp.sum(e, axis=-1, keepdims=True)
    o = jnp.einsum("bhqk,bkhd->bqhd", p, v, preferred_element_type=jnp.float32)
    attn = _mm_t(o.reshape(B * S, D), ow_ref[...]) + ob_ref[...]

    x = _layernorm(x + attn, g1_ref[...], be1_ref[...])
    h1 = jnp.maximum(_mm_t(x, w1_ref[...]) + b1_ref[...], 0.0)
    ff = _mm_t(h1, w2_ref[...]) + b2_ref[...]
    x = _layernorm(x + ff, g2_ref[...], be2_ref[...])
    x_sc[...] = x

    @pl.when(l == pl.num_programs(0) - 1)
    def _():
        logits = _mm_t(x, cw_ref[...]) + cb_ref[...]
        out_ref[...] = logits.astype(out_ref.dtype)


def vit_hubert_transformer_forward(x, params, nhead):
    """Single pallas_call, gridded over encoder layers; weights streamed per layer."""
    B, S, D = x.shape
    L = params["out_w"].shape[0]
    F = params["w1"].shape[1]
    C = params["cls_w"].shape[0]
    C_pad = max(128, ((C + 127) // 128) * 128)              # lane-dense classifier output
    wdt = params["out_w"].dtype

    x2 = x.reshape(B * S, D).astype(jnp.float32)

    f32 = lambda a: a.astype(jnp.float32)
    row = lambda a: f32(a).reshape(L, 1, -1)                # (L, 1, feat) — no in-kernel reshapes

    cls_w = jnp.zeros((C_pad, D), wdt).at[:C, :].set(params["cls_w"])
    cls_b = jnp.zeros((1, C_pad), jnp.float32).at[:, :C].set(f32(params["cls_b"]).reshape(1, C))

    def per_layer(*s):                                      # stacked (L, ...) weight, one block per layer
        return pl.BlockSpec((pl.Squeezed(),) + s, lambda l, n=len(s): (l,) + (0,) * n)

    def shared(*s):                                         # fetched once, resident across all layers
        return pl.BlockSpec(s, lambda l, n=len(s): (0,) * n)

    common_args = (
        params["out_w"], row(params["out_b"]),
        params["w1"], row(params["b1"]),
        params["w2"], row(params["b2"]),
        row(params["g1"]), row(params["be1"]),
        row(params["g2"]), row(params["be2"]),
        cls_w, cls_b,
    )
    common_specs = [
        per_layer(D, D), per_layer(1, D),
        per_layer(F, D), per_layer(1, F),
        per_layer(D, F), per_layer(1, D),
        per_layer(1, D), per_layer(1, D),
        per_layer(1, D), per_layer(1, D),
        shared(C_pad, D), shared(1, C_pad),
    ]

    if S == 1:
        # Only the V projection of in_proj is ever needed (softmax over 1 key is identity).
        v_w = params["in_w"][:, 2 * D:, :]                  # (L, D, D)
        v_b = row(params["in_b"][:, 2 * D:])                # (L, 1, D)
        kernel = _encoder_s1_kernel
        args = (x2, v_w, v_b) + common_args
        in_specs = [shared(B * S, D), per_layer(D, D), per_layer(1, D)] + common_specs
    else:
        kernel = functools.partial(_encoder_general_kernel, nhead=nhead, B=B, S=S)
        args = (x2, params["in_w"], row(params["in_b"])) + common_args
        in_specs = [shared(B * S, D), per_layer(3 * D, D), per_layer(1, 3 * D)] + common_specs

    out = pl.pallas_call(
        kernel,
        grid=(L,),
        out_shape=jax.ShapeDtypeStruct((B * S, C_pad), jnp.float32),
        in_specs=in_specs,
        out_specs=pl.BlockSpec((B * S, C_pad), lambda l: (0, 0)),
        scratch_shapes=[pltpu.VMEM((B * S, D), jnp.float32)],   # persistent activation
        compiler_params=pltpu.CompilerParams(
            dimension_semantics=("arbitrary",),
            vmem_limit_bytes=_vmem_limit_bytes()),
    )(*args)

    if S == 1:
        return out[:, :C]                       # matches .squeeze(1) -> (B, C)
    return out.reshape(B, S, C_pad)[:, :, :C]   # squeeze(1) is a no-op for S > 1


def init_params(key, num_layers, d_model, d_ff, num_classes, weight_dtype=jnp.bfloat16):
    """Deterministic synthetic parameters; PyTorch (out, in) convention; bf16 weight matrices."""
    ks = jax.random.split(key, 14)
    rnd = lambda k, shape, s=0.05: jax.random.normal(k, shape, jnp.float32) * s
    wd = lambda a: a.astype(weight_dtype)
    L, D, F, C = num_layers, d_model, d_ff, num_classes
    return dict(
        in_w=wd(rnd(ks[0], (L, 3 * D, D))),  in_b=rnd(ks[1], (L, 3 * D)),
        out_w=wd(rnd(ks[2], (L, D, D))),     out_b=rnd(ks[3], (L, D)),
        w1=wd(rnd(ks[4], (L, F, D))),        b1=rnd(ks[5], (L, F)),
        w2=wd(rnd(ks[6], (L, D, F))),        b2=rnd(ks[7], (L, D)),
        g1=jnp.ones((L, D), jnp.float32) + rnd(ks[8], (L, D), 0.01),
        be1=rnd(ks[9], (L, D), 0.01),
        g2=jnp.ones((L, D), jnp.float32) + rnd(ks[10], (L, D), 0.01),
        be2=rnd(ks[11], (L, D), 0.01),
        cls_w=wd(rnd(ks[12], (C, D))),       cls_b=rnd(ks[13], (1, C)),
    )


def reference_forward(x, params, nhead):
    """Pure-JAX reference mirroring nn.TransformerEncoder(+Linear) with the same bf16
    matmul-input rounding as the kernel (bf16 operands, f32 accumulation)."""
    B, S, D = x.shape
    L = params["in_w"].shape[0]
    hd = D // nhead

    def mm(a, w):  # a (..., in) f32, w (out, in) bf16/f32
        a16 = a.astype(jnp.bfloat16).astype(jnp.float32)
        return jnp.einsum("...i,oi->...o", a16, w.astype(jnp.float32))

    def ln(t, g, b):
        mu = t.mean(-1, keepdims=True)
        var = ((t - mu) ** 2).mean(-1, keepdims=True)
        return (t - mu) / jnp.sqrt(var + 1e-5) * g + b

    h = x.astype(jnp.float32)
    for l in range(L):
        qkv = mm(h, params["in_w"][l]) + params["in_b"][l].astype(jnp.float32)
        q, k, v = jnp.split(qkv, 3, axis=-1)
        to_heads = lambda t: t.reshape(B, S, nhead, hd).transpose(0, 2, 1, 3)
        qh = to_heads(q) * (1.0 / math.sqrt(hd))
        kh, vh = to_heads(k), to_heads(v)
        s = jnp.einsum("bhqd,bhkd->bhqk", qh, kh)
        p = jax.nn.softmax(s, axis=-1)
        o = jnp.einsum("bhqk,bhkd->bhqd", p, vh).transpose(0, 2, 1, 3).reshape(B, S, D)
        attn = mm(o, params["out_w"][l]) + params["out_b"][l].astype(jnp.float32)
        h = ln(h + attn, params["g1"][l], params["be1"][l])
        ff = jnp.maximum(mm(h, params["w1"][l]) + params["b1"][l].astype(jnp.float32), 0.0)
        ff = mm(ff, params["w2"][l]) + params["b2"][l].astype(jnp.float32)
        h = ln(h + ff, params["g2"][l], params["be2"][l])
    h = h[:, 0, :]  # .squeeze(1)
    return mm(h, params["cls_w"]) + params["cls_b"][0].astype(jnp.float32)


if __name__ == "__main__":
    # Small shapes consistent with the module: seq length 1 (forward uses .squeeze(1)).
    B, S = 2, 1
    D = 32                      # stand-in for vit.num_features + hubert.hidden_size
    nhead = 4
    num_layers = 2
    num_classes = 8
    d_ff = D // 2               # dim_feedforward = d_model // 2

    key = jax.random.PRNGKey(0)
    kx, kp = jax.random.split(key)
    combined_feature = jax.random.normal(kx, (B, S, D), jnp.float32)
    params = init_params(kp, num_layers, D, d_ff, num_classes)

    logits = vit_hubert_transformer_forward(combined_feature, params, nhead)
    logits = jax.block_until_ready(logits)

    ref = reference_forward(combined_feature, params, nhead)
    assert logits.shape == (B, num_classes)
    assert jnp.allclose(logits, ref, atol=1e-3, rtol=1e-3), (logits, ref)
    print("KERNEL_OK")
</pallas_src>

<mosaic_0001>
module attributes {stable_mosaic.version = 11 : i64} {
  func.func @_encoder_s1_kernel(%arg0: i32, %arg1: memref<2x32xf32, #tpu.memory_space<vmem>>, %arg2: memref<1x32x32xbf16, #tpu.memory_space<vmem>>, %arg3: memref<1x1x32xf32, #tpu.memory_space<vmem>>, %arg4: memref<1x32x32xbf16, #tpu.memory_space<vmem>>, %arg5: memref<1x1x32xf32, #tpu.memory_space<vmem>>, %arg6: memref<1x16x32xbf16, #tpu.memory_space<vmem>>, %arg7: memref<1x1x16xf32, #tpu.memory_space<vmem>>, %arg8: memref<1x32x16xbf16, #tpu.memory_space<vmem>>, %arg9: memref<1x1x32xf32, #tpu.memory_space<vmem>>, %arg10: memref<1x1x32xf32, #tpu.memory_space<vmem>>, %arg11: memref<1x1x32xf32, #tpu.memory_space<vmem>>, %arg12: memref<1x1x32xf32, #tpu.memory_space<vmem>>, %arg13: memref<1x1x32xf32, #tpu.memory_space<vmem>>, %arg14: memref<128x32xbf16, #tpu.memory_space<vmem>>, %arg15: memref<1x128xf32, #tpu.memory_space<vmem>>, %arg16: memref<2x128xf32, #tpu.memory_space<vmem>>, %arg17: memref<2x32xf32, #tpu.memory_space<vmem>>) attributes {dimension_semantics = [#tpu.dimension_semantics<arbitrary>], iteration_bounds = array<i64: 2>, scalar_prefetch = 0 : i64, scratch_operands = 1 : i64, tpu.core_type = #tpu.core_type<tc>, window_params = [{pipeline_mode = #tpu.pipeline_mode<synchronous>, transform_indices = @transform_0, window_bounds = array<i64: 2, 32>}, {transform_indices = @transform_1, window_bounds = array<i64: 1, 32, 32>}, {transform_indices = @transform_2, window_bounds = array<i64: 1, 1, 32>}, {transform_indices = @transform_3, window_bounds = array<i64: 1, 32, 32>}, {transform_indices = @transform_4, window_bounds = array<i64: 1, 1, 32>}, {transform_indices = @transform_5, window_bounds = array<i64: 1, 16, 32>}, {transform_indices = @transform_6, window_bounds = array<i64: 1, 1, 16>}, {transform_indices = @transform_7, window_bounds = array<i64: 1, 32, 16>}, {transform_indices = @transform_8, window_bounds = array<i64: 1, 1, 32>}, {transform_indices = @transform_9, window_bounds = array<i64: 1, 1, 32>}, {transform_indices = @transform_10, window_bounds = array<i64: 1, 1, 32>}, {transform_indices = @transform_11, window_bounds = array<i64: 1, 1, 32>}, {transform_indices = @transform_12, window_bounds = array<i64: 1, 1, 32>}, {pipeline_mode = #tpu.pipeline_mode<synchronous>, transform_indices = @transform_13, window_bounds = array<i64: 128, 32>}, {pipeline_mode = #tpu.pipeline_mode<synchronous>, transform_indices = @transform_14, window_bounds = array<i64: 1, 128>}, {pipeline_mode = #tpu.pipeline_mode<synchronous>, transform_indices = @transform_15, window_bounds = array<i64: 2, 128>}]} {
    %c0_i32 = arith.constant 0 : i32
    %0 = arith.cmpi eq, %arg0, %c0_i32 : i32
    %1 = arith.extui %0 : i1 to i32
    %c0_i32_0 = arith.constant 0 : i32
    %2 = arith.cmpi ne, %1, %c0_i32_0 : i32
    scf.if %2 {
      %c0_55 = arith.constant 0 : index
      %c0_56 = arith.constant 0 : index
      %96 = vector.load %arg1[%c0_55, %c0_56] : memref<2x32xf32, #tpu.memory_space<vmem>>, vector<2x32xf32>
      %c0_57 = arith.constant 0 : index
      %c0_58 = arith.constant 0 : index
      %97 = vector.load %arg17[%c0_57, %c0_58] : memref<2x32xf32, #tpu.memory_space<vmem>>, vector<2x32xf32>
      tpu.vector_store %arg17[%c0_57, %c0_58], %96 {strides = array<i32>} : memref<2x32xf32, #tpu.memory_space<vmem>>, vector<2x32xf32>,
    } else {
    }
    %c0 = arith.constant 0 : index
    %c0_1 = arith.constant 0 : index
    %3 = vector.load %arg17[%c0, %c0_1] : memref<2x32xf32, #tpu.memory_space<vmem>>, vector<2x32xf32>
    %c0_2 = arith.constant 0 : index
    %c0_3 = arith.constant 0 : index
    %c0_4 = arith.constant 0 : index
    %4 = vector.load %arg2[%c0_2, %c0_3, %c0_4] : memref<1x32x32xbf16, #tpu.memory_space<vmem>>, vector<1x32x32xbf16>
    %5 = vector.shape_cast %4 : vector<1x32x32xbf16> to vector<32x32xbf16>
    %6 = arith.truncf %3 : vector<2x32xf32> to vector<2x32xbf16>
    %cst = arith.constant dense<0.000000e+00> : vector<2x32xf32>
    %7 = tpu.matmul %6, %5, %cst {dimension_numbers = #tpu.dot_dimension_numbers<[1], [1], [0], [0], [0, 0, 1, 0], [], []>} : vector<2x32xbf16>, vector<32x32xbf16>, vector<2x32xf32> -> vector<2x32xf32>
    %c0_5 = arith.constant 0 : index
    %c0_6 = arith.constant 0 : index
    %c0_7 = arith.constant 0 : index
    %8 = vector.load %arg3[%c0_5, %c0_6, %c0_7] : memref<1x1x32xf32, #tpu.memory_space<vmem>>, vector<1x1x32xf32>
    %9 = vector.shape_cast %8 : vector<1x1x32xf32> to vector<1x32xf32>
    %10 = vector.broadcast %9 : vector<1x32xf32> to vector<2x32xf32>
    %11 = arith.addf %7, %10 : vector<2x32xf32>
    %c0_8 = arith.constant 0 : index
    %c0_9 = arith.constant 0 : index
    %c0_10 = arith.constant 0 : index
    %12 = vector.load %arg4[%c0_8, %c0_9, %c0_10] : memref<1x32x32xbf16, #tpu.memory_space<vmem>>, vector<1x32x32xbf16>
    %13 = vector.shape_cast %12 : vector<1x32x32xbf16> to vector<32x32xbf16>
    %14 = arith.truncf %11 : vector<2x32xf32> to vector<2x32xbf16>
    %cst_11 = arith.constant dense<0.000000e+00> : vector<2x32xf32>
    %15 = tpu.matmul %14, %13, %cst_11 {dimension_numbers = #tpu.dot_dimension_numbers<[1], [1], [0], [0], [0, 0, 1, 0], [], []>} : vector<2x32xbf16>, vector<32x32xbf16>, vector<2x32xf32> -> vector<2x32xf32>
    %c0_12 = arith.constant 0 : index
    %c0_13 = arith.constant 0 : index
    %c0_14 = arith.constant 0 : index
    %16 = vector.load %arg5[%c0_12, %c0_13, %c0_14] : memref<1x1x32xf32, #tpu.memory_space<vmem>>, vector<1x1x32xf32>
    %17 = vector.shape_cast %16 : vector<1x1x32xf32> to vector<1x32xf32>
    %18 = vector.broadcast %17 : vector<1x32xf32> to vector<2x32xf32>
    %19 = arith.addf %15, %18 : vector<2x32xf32>
    %20 = arith.addf %3, %19 : vector<2x32xf32>
    %c0_15 = arith.constant 0 : index
    %c0_16 = arith.constant 0 : index
    %c0_17 = arith.constant 0 : index
    %21 = vector.load %arg10[%c0_15, %c0_16, %c0_17] : memref<1x1x32xf32, #tpu.memory_space<vmem>>, vector<1x1x32xf32>
    %22 = vector.shape_cast %21 : vector<1x1x32xf32> to vector<1x32xf32>
    %c0_18 = arith.constant 0 : index
    %c0_19 = arith.constant 0 : index
    %c0_20 = arith.constant 0 : index
    %23 = vector.load %arg11[%c0_18, %c0_19, %c0_20] : memref<1x1x32xf32, #tpu.memory_space<vmem>>, vector<1x1x32xf32>
    %24 = vector.shape_cast %23 : vector<1x1x32xf32> to vector<1x32xf32>
    %cst_21 = arith.constant dense<0.000000e+00> : vector<2xf32>
    %25 = vector.multi_reduction <add>, %20, %cst_21 [1] : vector<2x32xf32> to vector<2xf32>
    %26 = vector.shape_cast %25 : vector<2xf32> to vector<2x1xf32>
    %cst_22 = arith.constant 3.200000e+01 : f32
    %27 = vector.broadcast %cst_22 : f32 to vector<2x1xf32>
    %28 = arith.divf %26, %27 : vector<2x1xf32>
    %29 = vector.broadcast %28 : vector<2x1xf32> to vector<2x32xf32>
    %30 = arith.subf %20, %29 : vector<2x32xf32>
    %31 = arith.mulf %30, %30 : vector<2x32xf32>
    %cst_23 = arith.constant dense<0.000000e+00> : vector<2xf32>
    %32 = vector.multi_reduction <add>, %31, %cst_23 [1] : vector<2x32xf32> to vector<2xf32>
    %33 = vector.shape_cast %32 : vector<2xf32> to vector<2x1xf32>
    %cst_24 = arith.constant 3.200000e+01 : f32
    %34 = vector.broadcast %cst_24 : f32 to vector<2x1xf32>
    %35 = arith.divf %33, %34 : vector<2x1xf32>
    %36 = vector.broadcast %28 : vector<2x1xf32> to vector<2x32xf32>
    %37 = arith.subf %20, %36 : vector<2x32xf32>
    %cst_25 = arith.constant 9.99999974E-6 : f32
    %38 = vector.broadcast %cst_25 : f32 to vector<2x1xf32>
    %39 = arith.addf %35, %38 : vector<2x1xf32>
    %40 = math.rsqrt %39 : vector<2x1xf32>
    %41 = vector.broadcast %40 : vector<2x1xf32> to vector<2x32xf32>
    %42 = arith.mulf %37, %41 : vector<2x32xf32>
    %43 = vector.broadcast %22 : vector<1x32xf32> to vector<2x32xf32>
    %44 = arith.mulf %42, %43 : vector<2x32xf32>
    %45 = vector.broadcast %24 : vector<1x32xf32> to vector<2x32xf32>
    %46 = arith.addf %44, %45 : vector<2x32xf32>
    %c0_26 = arith.constant 0 : index
    %c0_27 = arith.constant 0 : index
    %c0_28 = arith.constant 0 : index
    %47 = vector.load %arg6[%c0_26, %c0_27, %c0_28] : memref<1x16x32xbf16, #tpu.memory_space<vmem>>, vector<1x16x32xbf16>
    %48 = vector.shape_cast %47 : vector<1x16x32xbf16> to vector<16x32xbf16>
    %49 = arith.truncf %46 : vector<2x32xf32> to vector<2x32xbf16>
    %cst_29 = arith.constant dense<0.000000e+00> : vector<2x16xf32>
    %50 = tpu.matmul %49, %48, %cst_29 {dimension_numbers = #tpu.dot_dimension_numbers<[1], [1], [0], [0], [0, 0, 1, 0], [], []>} : vector<2x32xbf16>, vector<16x32xbf16>, vector<2x16xf32> -> vector<2x16xf32>
    %c0_30 = arith.constant 0 : index
    %c0_31 = arith.constant 0 : index
    %c0_32 = arith.constant 0 : index
    %51 = vector.load %arg7[%c0_30, %c0_31, %c0_32] : memref<1x1x16xf32, #tpu.memory_space<vmem>>, vector<1x1x16xf32>
    %52 = vector.shape_cast %51 : vector<1x1x16xf32> to vector<1x16xf32>
    %53 = vector.broadcast %52 : vector<1x16xf32> to vector<2x16xf32>
    %54 = arith.addf %50, %53 : vector<2x16xf32>
    %cst_33 = arith.constant 0.000000e+00 : f32
    %55 = vector.broadcast %cst_33 : f32 to vector<2x16xf32>
    %56 = arith.maximumf %54, %55 : vector<2x16xf32>
    %c0_34 = arith.constant 0 : index
    %c0_35 = arith.constant 0 : index
    %c0_36 = arith.constant 0 : index
    %57 = vector.load %arg8[%c0_34, %c0_35, %c0_36] : memref<1x32x16xbf16, #tpu.memory_space<vmem>>, vector<1x32x16xbf16>
    %58 = vector.shape_cast %57 : vector<1x32x16xbf16> to vector<32x16xbf16>
    %59 = arith.truncf %56 : vector<2x16xf32> to vector<2x16xbf16>
    %cst_37 = arith.constant dense<0.000000e+00> : vector<2x32xf32>
    %60 = tpu.matmul %59, %58, %cst_37 {dimension_numbers = #tpu.dot_dimension_numbers<[1], [1], [0], [0], [0, 0, 1, 0], [], []>} : vector<2x16xbf16>, vector<32x16xbf16>, vector<2x32xf32> -> vector<2x32xf32>
    %c0_38 = arith.constant 0 : index
    %c0_39 = arith.constant 0 : index
    %c0_40 = arith.constant 0 : index
    %61 = vector.load %arg9[%c0_38, %c0_39, %c0_40] : memref<1x1x32xf32, #tpu.memory_space<vmem>>, vector<1x1x32xf32>
    %62 = vector.shape_cast %61 : vector<1x1x32xf32> to vector<1x32xf32>
    %63 = vector.broadcast %62 : vector<1x32xf32> to vector<2x32xf32>
    %64 = arith.addf %60, %63 : vector<2x32xf32>
    %65 = arith.addf %46, %64 : vector<2x32xf32>
    %c0_41 = arith.constant 0 : index
    %c0_42 = arith.constant 0 : index
    %c0_43 = arith.constant 0 : index
    %66 = vector.load %arg12[%c0_41, %c0_42, %c0_43] : memref<1x1x32xf32, #tpu.memory_space<vmem>>, vector<1x1x32xf32>
    %67 = vector.shape_cast %66 : vector<1x1x32xf32> to vector<1x32xf32>
    %c0_44 = arith.constant 0 : index
    %c0_45 = arith.constant 0 : index
    %c0_46 = arith.constant 0 : index
    %68 = vector.load %arg13[%c0_44, %c0_45, %c0_46] : memref<1x1x32xf32, #tpu.memory_space<vmem>>, vector<1x1x32xf32>
    %69 = vector.shape_cast %68 : vector<1x1x32xf32> to vector<1x32xf32>
    %cst_47 = arith.constant dense<0.000000e+00> : vector<2xf32>
    %70 = vector.multi_reduction <add>, %65, %cst_47 [1] : vector<2x32xf32> to vector<2xf32>
    %71 = vector.shape_cast %70 : vector<2xf32> to vector<2x1xf32>
    %cst_48 = arith.constant 3.200000e+01 : f32
    %72 = vector.broadcast %cst_48 : f32 to vector<2x1xf32>
    %73 = arith.divf %71, %72 : vector<2x1xf32>
    %74 = vector.broadcast %73 : vector<2x1xf32> to vector<2x32xf32>
    %75 = arith.subf %65, %74 : vector<2x32xf32>
    %76 = arith.mulf %75, %75 : vector<2x32xf32>
    %cst_49 = arith.constant dense<0.000000e+00> : vector<2xf32>
    %77 = vector.multi_reduction <add>, %76, %cst_49 [1] : vector<2x32xf32> to vector<2xf32>
    %78 = vector.shape_cast %77 : vector<2xf32> to vector<2x1xf32>
    %cst_50 = arith.constant 3.200000e+01 : f32
    %79 = vector.broadcast %cst_50 : f32 to vector<2x1xf32>
    %80 = arith.divf %78, %79 : vector<2x1xf32>
    %81 = vector.broadcast %73 : vector<2x1xf32> to vector<2x32xf32>
    %82 = arith.subf %65, %81 : vector<2x32xf32>
    %cst_51 = arith.constant 9.99999974E-6 : f32
    %83 = vector.broadcast %cst_51 : f32 to vector<2x1xf32>
    %84 = arith.addf %80, %83 : vector<2x1xf32>
    %85 = math.rsqrt %84 : vector<2x1xf32>
    %86 = vector.broadcast %85 : vector<2x1xf32> to vector<2x32xf32>
    %87 = arith.mulf %82, %86 : vector<2x32xf32>
    %88 = vector.broadcast %67 : vector<1x32xf32> to vector<2x32xf32>
    %89 = arith.mulf %87, %88 : vector<2x32xf32>
    %90 = vector.broadcast %69 : vector<1x32xf32> to vector<2x32xf32>
    %91 = arith.addf %89, %90 : vector<2x32xf32>
    %c0_52 = arith.constant 0 : index
    %c0_53 = arith.constant 0 : index
    %92 = vector.load %arg17[%c0_52, %c0_53] : memref<2x32xf32, #tpu.memory_space<vmem>>, vector<2x32xf32>
    tpu.vector_store %arg17[%c0_52, %c0_53], %91 {strides = array<i32>} : memref<2x32xf32, #tpu.memory_space<vmem>>, vector<2x32xf32>,
    %c1_i32 = arith.constant 1 : i32
    %93 = arith.cmpi eq, %arg0, %c1_i32 : i32
    %94 = arith.extui %93 : i1 to i32
    %c0_i32_54 = arith.constant 0 : i32
    %95 = arith.cmpi ne, %94, %c0_i32_54 : i32
    scf.if %95 {
      %c0_55 = arith.constant 0 : index
      %c0_56 = arith.constant 0 : index
      %96 = vector.load %arg14[%c0_55, %c0_56] : memref<128x32xbf16, #tpu.memory_space<vmem>>, vector<128x32xbf16>
      %97 = arith.truncf %91 : vector<2x32xf32> to vector<2x32xbf16>
      %cst_57 = arith.constant dense<0.000000e+00> : vector<2x128xf32>
      %98 = tpu.matmul %97, %96, %cst_57 {dimension_numbers = #tpu.dot_dimension_numbers<[1], [1], [0], [0], [0, 0, 1, 0], [], []>} : vector<2x32xbf16>, vector<128x32xbf16>, vector<2x128xf32> -> vector<2x128xf32>
      %c0_58 = arith.constant 0 : index
      %c0_59 = arith.constant 0 : index
      %99 = vector.load %arg15[%c0_58, %c0_59] : memref<1x128xf32, #tpu.memory_space<vmem>>, vector<1x128xf32>
      %100 = vector.broadcast %99 : vector<1x128xf32> to vector<2x128xf32>
      %101 = arith.addf %98, %100 : vector<2x128xf32>
      %c0_60 = arith.constant 0 : index
      %c0_61 = arith.constant 0 : index
      %102 = vector.load %arg16[%c0_60, %c0_61] : memref<2x128xf32, #tpu.memory_space<vmem>>, vector<2x128xf32>
      tpu.vector_store %arg16[%c0_60, %c0_61], %101 {strides = array<i32>} : memref<2x128xf32, #tpu.memory_space<vmem>>, vector<2x128xf32>,
    } else {
    }
    return
  }
  func.func @transform_0(%arg0: i32) -> (i32, i32) {
    %c0_i32 = arith.constant 0 : i32
    %c0_i32_0 = arith.constant 0 : i32
    %c0_i32_1 = arith.constant 0 : i32
    return %c0_i32, %c0_i32_0 : i32, i32
  }
  func.func @transform_1(%arg0: i32) -> (i32, i32, i32) {
    %c0_i32 = arith.constant 0 : i32
    %c0_i32_0 = arith.constant 0 : i32
    %c0_i32_1 = arith.constant 0 : i32
    return %arg0, %c0_i32, %c0_i32_0 : i32, i32, i32
  }
  func.func @transform_2(%arg0: i32) -> (i32, i32, i32) {
    %c0_i32 = arith.constant 0 : i32
    %c0_i32_0 = arith.constant 0 : i32
    %c0_i32_1 = arith.constant 0 : i32
    return %arg0, %c0_i32, %c0_i32_0 : i32, i32, i32
  }
  func.func @transform_3(%arg0: i32) -> (i32, i32, i32) {
    %c0_i32 = arith.constant 0 : i32
    %c0_i32_0 = arith.constant 0 : i32
    %c0_i32_1 = arith.constant 0 : i32
    return %arg0, %c0_i32, %c0_i32_0 : i32, i32, i32
  }
  func.func @transform_4(%arg0: i32) -> (i32, i32, i32) {
    %c0_i32 = arith.constant 0 : i32
    %c0_i32_0 = arith.constant 0 : i32
    %c0_i32_1 = arith.constant 0 : i32
    return %arg0, %c0_i32, %c0_i32_0 : i32, i32, i32
  }
  func.func @transform_5(%arg0: i32) -> (i32, i32, i32) {
    %c0_i32 = arith.constant 0 : i32
    %c0_i32_0 = arith.constant 0 : i32
    %c0_i32_1 = arith.constant 0 : i32
    return %arg0, %c0_i32, %c0_i32_0 : i32, i32, i32
  }
  func.func @transform_6(%arg0: i32) -> (i32, i32, i32) {
    %c0_i32 = arith.constant 0 : i32
    %c0_i32_0 = arith.constant 0 : i32
    %c0_i32_1 = arith.constant 0 : i32
    return %arg0, %c0_i32, %c0_i32_0 : i32, i32, i32
  }
  func.func @transform_7(%arg0: i32) -> (i32, i32, i32) {
    %c0_i32 = arith.constant 0 : i32
    %c0_i32_0 = arith.constant 0 : i32
    %c0_i32_1 = arith.constant 0 : i32
    return %arg0, %c0_i32, %c0_i32_0 : i32, i32, i32
  }
  func.func @transform_8(%arg0: i32) -> (i32, i32, i32) {
    %c0_i32 = arith.constant 0 : i32
    %c0_i32_0 = arith.constant 0 : i32
    %c0_i32_1 = arith.constant 0 : i32
    return %arg0, %c0_i32, %c0_i32_0 : i32, i32, i32
  }
  func.func @transform_9(%arg0: i32) -> (i32, i32, i32) {
    %c0_i32 = arith.constant 0 : i32
    %c0_i32_0 = arith.constant 0 : i32
    %c0_i32_1 = arith.constant 0 : i32
    return %arg0, %c0_i32, %c0_i32_0 : i32, i32, i32
  }
  func.func @transform_10(%arg0: i32) -> (i32, i32, i32) {
    %c0_i32 = arith.constant 0 : i32
    %c0_i32_0 = arith.constant 0 : i32
    %c0_i32_1 = arith.constant 0 : i32
    return %arg0, %c0_i32, %c0_i32_0 : i32, i32, i32
  }
  func.func @transform_11(%arg0: i32) -> (i32, i32, i32) {
    %c0_i32 = arith.constant 0 : i32
    %c0_i32_0 = arith.constant 0 : i32
    %c0_i32_1 = arith.constant 0 : i32
    return %arg0, %c0_i32, %c0_i32_0 : i32, i32, i32
  }
  func.func @transform_12(%arg0: i32) -> (i32, i32, i32) {
    %c0_i32 = arith.constant 0 : i32
    %c0_i32_0 = arith.constant 0 : i32
    %c0_i32_1 = arith.constant 0 : i32
    return %arg0, %c0_i32, %c0_i32_0 : i32, i32, i32
  }
  func.func @transform_13(%arg0: i32) -> (i32, i32) {
    %c0_i32 = arith.constant 0 : i32
    %c0_i32_0 = arith.constant 0 : i32
    %c0_i32_1 = arith.constant 0 : i32
    return %c0_i32, %c0_i32_0 : i32, i32
  }
  func.func @transform_14(%arg0: i32) -> (i32, i32) {
    %c0_i32 = arith.constant 0 : i32
    %c0_i32_0 = arith.constant 0 : i32
    %c0_i32_1 = arith.constant 0 : i32
    return %c0_i32, %c0_i32_0 : i32, i32
  }
  func.func @transform_15(%arg0: i32) -> (i32, i32) {
    %c0_i32 = arith.constant 0 : i32
    %c0_i32_0 = arith.constant 0 : i32
    %c0_i32_1 = arith.constant 0 : i32
    return %c0_i32, %c0_i32_0 : i32, i32
  }
}

</mosaic_0001>

<llo_original>
// kernel: tpu_custom_call.1
$region0: #{tpu_custom_call.1}
  #allocation0 [shape = 'u32[]', space=smem, size = 0x4, offset = 0x4, fixed_abs, tag = 'smem constant byte address 0x4 - core index']
  #allocation1 [shape = 'u32[144,128]{1,0:T(1,128)}', space=vmem, size = 0x12000, scoped, tag = 'internal scratch']
  #allocation2 [shape = 'f32[2,32]{1,0:T(2,128)}', space=vmem, size = 0x400, scoped, tag = 'scratch operand']
  %s0 = inlined_call_operand.vmem [shape: f32[2,32], index: 0, kind: input, shape index: {}]
  %s1 = inlined_call_operand.vmem [shape: bf16[2,32,32], index: 1, kind: input, shape index: {}]
  %s2 = inlined_call_operand.vmem [shape: f32[2,1,32], index: 2, kind: input, shape index: {}]
  %s3 = inlined_call_operand.vmem [shape: bf16[2,32,32], index: 3, kind: input, shape index: {}]
  %s4 = inlined_call_operand.vmem [shape: f32[2,1,32], index: 4, kind: input, shape index: {}]
  %s5 = inlined_call_operand.vmem [shape: bf16[2,16,32], index: 5, kind: input, shape index: {}]
  %s6 = inlined_call_operand.vmem [shape: f32[2,1,16], index: 6, kind: input, shape index: {}]
  %s7 = inlined_call_operand.vmem [shape: bf16[2,32,16], index: 7, kind: input, shape index: {}]
  %s8 = inlined_call_operand.vmem [shape: f32[2,1,32], index: 8, kind: input, shape index: {}]
  %s9 = inlined_call_operand.vmem [shape: f32[2,1,32], index: 9, kind: input, shape index: {}]
  %s10 = inlined_call_operand.vmem [shape: f32[2,1,32], index: 10, kind: input, shape index: {}]
  %s11 = inlined_call_operand.vmem [shape: f32[2,1,32], index: 11, kind: input, shape index: {}]
  %s12 = inlined_call_operand.vmem [shape: f32[2,1,32], index: 12, kind: input, shape index: {}]
  %s13 = inlined_call_operand.vmem [shape: bf16[128,32], index: 13, kind: input, shape index: {}]
  %s14 = inlined_call_operand.vmem [shape: f32[1,128], index: 14, kind: input, shape index: {}]
  %s15 = inlined_call_operand.hbm [shape: f32[2,128], index: 15, kind: output, shape index: {}]
  %s16 = sld [smem:[#allocation0]]
  $region101: #{tpu_custom_call.1} parent=0
    _
  %s18 = ssub.s32 1, %s16
  %s19 = scalar_select 0, %s18, %s16
  $region1: #{tpu_custom_call.1} parent=0
    #allocation3 [shape = 'u8[1024]{0}', space=vmem, size = 0x400, scoped, tag = 'output window, operand 0, single buffered']
    #allocation4 [shape = 's32[2]{0}', space=sflag, size = 0x8, scoped, tag = 'scoped memory for tpu_custom_call.1']
    %20 = vsyncpa [#allocation4], 0
    loop: start=0, step=1, limit=4
    $region2: #{tpu_custom_call.1} parent=1 // loop_pre_header
      _
    $region3: #{tpu_custom_call.1} parent=1 // loop_header
      %s22 = sphi 0, %s26
      %p23 = scmp.ge.s32.totalorder %s22, 4
      %s30 = sphi 0, %s30
      %s32 = sphi 0, %s30
      %s33 = sphi 0, %s32
      %s47 = sphi 0, %s33
      %s53 = sphi 0, %s55
      %s56 = sphi 0, %s53
      %s57 = sphi 0, %s56
      %s73 = sphi 0, %s57
      %s79 = sphi 0, %s81
      %s82 = sphi 0, %s79
      %s83 = sphi 0, %s82
      %s99 = sphi 0, %s83
      %s105 = sphi 0, %s107
      %s108 = sphi 0, %s105
      %s109 = sphi 0, %s108
      %s125 = sphi 0, %s109
      %s131 = sphi 0, %s133
      %s134 = sphi 0, %s131
      %s135 = sphi 0, %s134
      %s151 = sphi 0, %s135
      %s157 = sphi 0, %s159
      %s160 = sphi 0, %s157
      %s161 = sphi 0, %s160
      %s177 = sphi 0, %s161
      %s183 = sphi 0, %s185
      %s186 = sphi 0, %s183
      %s187 = sphi 0, %s186
      %s203 = sphi 0, %s187
      %s209 = sphi 0, %s211
      %s212 = sphi 0, %s209
      %s213 = sphi 0, %s212
      %s229 = sphi 0, %s213
      %s235 = sphi 0, %s237
      %s238 = sphi 0, %s235
      %s239 = sphi 0, %s238
      %s255 = sphi 0, %s239
      %s261 = sphi 0, %s263
      %s264 = sphi 0, %s261
      %s265 = sphi 0, %s264
      %s281 = sphi 0, %s265
      %s287 = sphi 0, %s289
      %s290 = sphi 0, %s287
      %s291 = sphi 0, %s290
      %s307 = sphi 0, %s291
      %s313 = sphi 0, %s315
      %s316 = sphi 0, %s313
      %s317 = sphi 0, %s316
      %s333 = sphi 0, %s317
      %s339 = sphi 0, %s341
      %s342 = sphi 0, %s339
      %s343 = sphi 0, %s342
      %s359 = sphi 0, %s343
      %s363 = sphi 0, %s363
      %s365 = sphi 0, %s363
      %s366 = sphi 0, %s365
      %s380 = sphi 0, %s366
      %s384 = sphi 0, %s384
      %s386 = sphi 0, %s384
      %s387 = sphi 0, %s386
      %s401 = sphi 0, %s387
      %s405 = sphi 0, %s405
      %s407 = sphi 0, %s405
      %s408 = sphi 0, %s407
      %s422 = sphi 0, %s408
    $region4: #{tpu_custom_call.1} parent=1 // loop_header_branch
      %25 = sbr.rel (%p23) target = $region8
    $region5: #{tpu_custom_call.1} parent=1 // loop_body
      %s27 = ssub.s32 %s22, 1
      %s28 = ssub.s32 %s22, 2
      %s29 = sadd.s32 %s22, 1
      %s31 = sadd.s32 %s30, 1
      %p34 = scmp.eq.s32.totalorder %s22, 1
      %p35 = scmp.ne.s32.totalorder %s30, %s32
      %p36 = scmp.eq.s32.totalorder %s22, 0
      %p37 = por %p35, %p36
      %p38 = scmp.ne.s32.totalorder %s30, %s32
      %p39 = scmp.eq.s32.totalorder %s27, 1
      %p40 = por %p38, %p39
      %p41 = scmp.ne.s32.totalorder %s32, %s33
      %p42 = scmp.eq.s32.totalorder %s27, 0
      %p43 = por %p41, %p42
      %p44 = scmp.ne.s32.totalorder %s32, %s33
      %p45 = scmp.eq.s32.totalorder %s28, 1
      %p46 = por %p44, %p45
      %p48 = scmp.ne.s32.totalorder %s33, %s47
      %p49 = scmp.eq.s32.totalorder %s28, 0
      %p50 = por %p48, %p49
      %s51 = ssub.s32 %s22, %s29
      %p52 = scmp.eq.s32.totalorder %s51, 0
      %s54 = sadd.s32 %s53, 1
      %s55 = scalar_select %p52, %s53, %s54
      %p58 = pneg %p52
      %p59 = scmp.eq.s32.totalorder %s22, 1
      %p60 = por %p58, %p59
      %p61 = scmp.ne.s32.totalorder %s53, %s56
      %p62 = scmp.eq.s32.totalorder %s22, 0
      %p63 = por %p61, %p62
      %p64 = scmp.ne.s32.totalorder %s53, %s56
      %p65 = scmp.eq.s32.totalorder %s27, 1
      %p66 = por %p64, %p65
      %p67 = scmp.ne.s32.totalorder %s56, %s57
      %p68 = scmp.eq.s32.totalorder %s27, 0
      %p69 = por %p67, %p68
      %p70 = scmp.ne.s32.totalorder %s56, %s57
      %p71 = scmp.eq.s32.totalorder %s28, 1
      %p72 = por %p70, %p71
      %p74 = scmp.ne.s32.totalorder %s57, %s73
      %p75 = scmp.eq.s32.totalorder %s28, 0
      %p76 = por %p74, %p75
      %s77 = ssub.s32 %s22, %s29
      %p78 = scmp.eq.s32.totalorder %s77, 0
      %s80 = sadd.s32 %s79, 1
      %s81 = scalar_select %p78, %s79, %s80
      %p84 = pneg %p78
      %p85 = scmp.eq.s32.totalorder %s22, 1
      %p86 = por %p84, %p85
      %p87 = scmp.ne.s32.totalorder %s79, %s82
      %p88 = scmp.eq.s32.totalorder %s22, 0
      %p89 = por %p87, %p88
      %p90 = scmp.ne.s32.totalorder %s79, %s82
      %p91 = scmp.eq.s32.totalorder %s27, 1
      %p92 = por %p90, %p91
      %p93 = scmp.ne.s32.totalorder %s82, %s83
      %p94 = scmp.eq.s32.totalorder %s27, 0
      %p95 = por %p93, %p94
      %p96 = scmp.ne.s32.totalorder %s82, %s83
      %p97 = scmp.eq.s32.totalorder %s28, 1
      %p98 = por %p96, %p97
      %p100 = scmp.ne.s32.totalorder %s83, %s99
      %p101 = scmp.eq.s32.totalorder %s28, 0
      %p102 = por %p100, %p101
      %s103 = ssub.s32 %s22, %s29
      %p104 = scmp.eq.s32.totalorder %s103, 0
      %s106 = sadd.s32 %s105, 1
      %s107 = scalar_select %p104, %s105, %s106
      %p110 = pneg %p104
      %p111 = scmp.eq.s32.totalorder %s22, 1
      %p112 = por %p110, %p111
      %p113 = scmp.ne.s32.totalorder %s105, %s108
      %p114 = scmp.eq.s32.totalorder %s22, 0
      %p115 = por %p113, %p114
      %p116 = scmp.ne.s32.totalorder %s105, %s108
      %p117 = scmp.eq.s32.totalorder %s27, 1
      %p118 = por %p116, %p117
      %p119 = scmp.ne.s32.totalorder %s108, %s109
      %p120 = scmp.eq.s32.totalorder %s27, 0
      %p121 = por %p119, %p120
      %p122 = scmp.ne.s32.totalorder %s108, %s109
      %p123 = scmp.eq.s32.totalorder %s28, 1
      %p124 = por %p122, %p123
      %p126 = scmp.ne.s32.totalorder %s109, %s125
      %p127 = scmp.eq.s32.totalorder %s28, 0
      %p128 = por %p126, %p127
      %s129 = ssub.s32 %s22, %s29
      %p130 = scmp.eq.s32.totalorder %s129, 0
      %s132 = sadd.s32 %s131, 1
      %s133 = scalar_select %p130, %s131, %s132
      %p136 = pneg %p130
      %p137 = scmp.eq.s32.totalorder %s22, 1
      %p138 = por %p136, %p137
      %p139 = scmp.ne.s32.totalorder %s131, %s134
      %p140 = scmp.eq.s32.totalorder %s22, 0
      %p141 = por %p139, %p140
      %p142 = scmp.ne.s32.totalorder %s131, %s134
      %p143 = scmp.eq.s32.totalorder %s27, 1
      %p144 = por %p142, %p143
      %p145 = scmp.ne.s32.totalorder %s134, %s135
      %p146 = scmp.eq.s32.totalorder %s27, 0
      %p147 = por %p145, %p146
      %p148 = scmp.ne.s32.totalorder %s134, %s135
      %p149 = scmp.eq.s32.totalorder %s28, 1
      %p150 = por %p148, %p149
      %p152 = scmp.ne.s32.totalorder %s135, %s151
      %p153 = scmp.eq.s32.totalorder %s28, 0
      %p154 = por %p152, %p153
      %s155 = ssub.s32 %s22, %s29
      %p156 = scmp.eq.s32.totalorder %s155, 0
      %s158 = sadd.s32 %s157, 1
      %s159 = scalar_select %p156, %s157, %s158
      %p162 = pneg %p156
      %p163 = scmp.eq.s32.totalorder %s22, 1
      %p164 = por %p162, %p163
      %p165 = scmp.ne.s32.totalorder %s157, %s160
      %p166 = scmp.eq.s32.totalorder %s22, 0
      %p167 = por %p165, %p166
      %p168 = scmp.ne.s32.totalorder %s157, %s160
      %p169 = scmp.eq.s32.totalorder %s27, 1
      %p170 = por %p168, %p169
      %p171 = scmp.ne.s32.totalorder %s160, %s161
      %p172 = scmp.eq.s32.totalorder %s27, 0
      %p173 = por %p171, %p172
      %p174 = scmp.ne.s32.totalorder %s160, %s161
      %p175 = scmp.eq.s32.totalorder %s28, 1
      %p176 = por %p174, %p175
      %p178 = scmp.ne.s32.totalorder %s161, %s177
      %p179 = scmp.eq.s32.totalorder %s28, 0
      %p180 = por %p178, %p179
      %s181 = ssub.s32 %s22, %s29
      %p182 = scmp.eq.s32.totalorder %s181, 0
      %s184 = sadd.s32 %s183, 1
      %s185 = scalar_select %p182, %s183, %s184
      %p188 = pneg %p182
      %p189 = scmp.eq.s32.totalorder %s22, 1
      %p190 = por %p188, %p189
      %p191 = scmp.ne.s32.totalorder %s183, %s186
      %p192 = scmp.eq.s32.totalorder %s22, 0
      %p193 = por %p191, %p192
      %p194 = scmp.ne.s32.totalorder %s183, %s186
      %p195 = scmp.eq.s32.totalorder %s27, 1
      %p196 = por %p194, %p195
      %p197 = scmp.ne.s32.totalorder %s186, %s187
      %p198 = scmp.eq.s32.totalorder %s27, 0
      %p199 = por %p197, %p198
      %p200 = scmp.ne.s32.totalorder %s186, %s187
      %p201 = scmp.eq.s32.totalorder %s28, 1
      %p202 = por %p200, %p201
      %p204 = scmp.ne.s32.totalorder %s187, %s203
      %p205 = scmp.eq.s32.totalorder %s28, 0
      %p206 = por %p204, %p205
      %s207 = ssub.s32 %s22, %s29
      %p208 = scmp.eq.s32.totalorder %s207, 0
      %s210 = sadd.s32 %s209, 1
      %s211 = scalar_select %p208, %s209, %s210
      %p214 = pneg %p208
      %p215 = scmp.eq.s32.totalorder %s22, 1
      %p216 = por %p214, %p215
      %p217 = scmp.ne.s32.totalorder %s209, %s212
      %p218 = scmp.eq.s32.totalorder %s22, 0
      %p219 = por %p217, %p218
      %p220 = scmp.ne.s32.totalorder %s209, %s212
      %p221 = scmp.eq.s32.totalorder %s27, 1
      %p222 = por %p220, %p221
      %p223 = scmp.ne.s32.totalorder %s212, %s213
      %p224 = scmp.eq.s32.totalorder %s27, 0
      %p225 = por %p223, %p224
      %p226 = scmp.ne.s32.totalorder %s212, %s213
      %p227 = scmp.eq.s32.totalorder %s28, 1
      %p228 = por %p226, %p227
      %p230 = scmp.ne.s32.totalorder %s213, %s229
      %p231 = scmp.eq.s32.totalorder %s28, 0
      %p232 = por %p230, %p231
      %s233 = ssub.s32 %s22, %s29
      %p234 = scmp.eq.s32.totalorder %s233, 0
      %s236 = sadd.s32 %s235, 1
      %s237 = scalar_select %p234, %s235, %s236
      %p240 = pneg %p234
      %p241 = scmp.eq.s32.totalorder %s22, 1
      %p242 = por %p240, %p241
      %p243 = scmp.ne.s32.totalorder %s235, %s238
      %p244 = scmp.eq.s32.totalorder %s22, 0
      %p245 = por %p243, %p244
      %p246 = scmp.ne.s32.totalorder %s235, %s238
      %p247 = scmp.eq.s32.totalorder %s27, 1
      %p248 = por %p246, %p247
      %p249 = scmp.ne.s32.totalorder %s238, %s239
      %p250 = scmp.eq.s32.totalorder %s27, 0
      %p251 = por %p249, %p250
      %p252 = scmp.ne.s32.totalorder %s238, %s239
      %p253 = scmp.eq.s32.totalorder %s28, 1
      %p254 = por %p252, %p253
      %p256 = scmp.ne.s32.totalorder %s239, %s255
      %p257 = scmp.eq.s32.totalorder %s28, 0
      %p258 = por %p256, %p257
      %s259 = ssub.s32 %s22, %s29
      %p260 = scmp.eq.s32.totalorder %s259, 0
      %s262 = sadd.s32 %s261, 1
      %s263 = scalar_select %p260, %s261, %s262
      %p266 = pneg %p260
      %p267 = scmp.eq.s32.totalorder %s22, 1
      %p268 = por %p266, %p267
      %p269 = scmp.ne.s32.totalorder %s261, %s264
      %p270 = scmp.eq.s32.totalorder %s22, 0
      %p271 = por %p269, %p270
      %p272 = scmp.ne.s32.totalorder %s261, %s264
      %p273 = scmp.eq.s32.totalorder %s27, 1
      %p274 = por %p272, %p273
      %p275 = scmp.ne.s32.totalorder %s264, %s265
      %p276 = scmp.eq.s32.totalorder %s27, 0
      %p277 = por %p275, %p276
      %p278 = scmp.ne.s32.totalorder %s264, %s265
      %p279 = scmp.eq.s32.totalorder %s28, 1
      %p280 = por %p278, %p279
      %p282 = scmp.ne.s32.totalorder %s265, %s281
      %p283 = scmp.eq.s32.totalorder %s28, 0
      %p284 = por %p282, %p283
      %s285 = ssub.s32 %s22, %s29
      %p286 = scmp.eq.s32.totalorder %s285, 0
      %s288 = sadd.s32 %s287, 1
      %s289 = scalar_select %p286, %s287, %s288
      %p292 = pneg %p286
      %p293 = scmp.eq.s32.totalorder %s22, 1
      %p294 = por %p292, %p293
      %p295 = scmp.ne.s32.totalorder %s287, %s290
      %p296 = scmp.eq.s32.totalorder %s22, 0
      %p297 = por %p295, %p296
      %p298 = scmp.ne.s32.totalorder %s287, %s290
      %p299 = scmp.eq.s32.totalorder %s27, 1
      %p300 = por %p298, %p299
      %p301 = scmp.ne.s32.totalorder %s290, %s291
      %p302 = scmp.eq.s32.totalorder %s27, 0
      %p303 = por %p301, %p302
      %p304 = scmp.ne.s32.totalorder %s290, %s291
      %p305 = scmp.eq.s32.totalorder %s28, 1
      %p306 = por %p304, %p305
      %p308 = scmp.ne.s32.totalorder %s291, %s307
      %p309 = scmp.eq.s32.totalorder %s28, 0
      %p310 = por %p308, %p309
      %s311 = ssub.s32 %s22, %s29
      %p312 = scmp.eq.s32.totalorder %s311, 0
      %s314 = sadd.s32 %s313, 1
      %s315 = scalar_select %p312, %s313, %s314
      %p318 = pneg %p312
      %p319 = scmp.eq.s32.totalorder %s22, 1
      %p320 = por %p318, %p319
      %p321 = scmp.ne.s32.totalorder %s313, %s316
      %p322 = scmp.eq.s32.totalorder %s22, 0
      %p323 = por %p321, %p322
      %p324 = scmp.ne.s32.totalorder %s313, %s316
      %p325 = scmp.eq.s32.totalorder %s27, 1
      %p326 = por %p324, %p325
      %p327 = scmp.ne.s32.totalorder %s316, %s317
      %p328 = scmp.eq.s32.totalorder %s27, 0
      %p329 = por %p327, %p328
      %p330 = scmp.ne.s32.totalorder %s316, %s317
      %p331 = scmp.eq.s32.totalorder %s28, 1
      %p332 = por %p330, %p331
      %p334 = scmp.ne.s32.totalorder %s317, %s333
      %p335 = scmp.eq.s32.totalorder %s28, 0
      %p336 = por %p334, %p335
      %s337 = ssub.s32 %s22, %s29
      %p338 = scmp.eq.s32.totalorder %s337, 0
      %s340 = sadd.s32 %s339, 1
      %s341 = scalar_select %p338, %s339, %s340
      %p344 = pneg %p338
      %p345 = scmp.eq.s32.totalorder %s22, 1
      %p346 = por %p344, %p345
      %p347 = scmp.ne.s32.totalorder %s339, %s342
      %p348 = scmp.eq.s32.totalorder %s22, 0
      %p349 = por %p347, %p348
      %p350 = scmp.ne.s32.totalorder %s339, %s342
      %p351 = scmp.eq.s32.totalorder %s27, 1
      %p352 = por %p350, %p351
      %p353 = scmp.ne.s32.totalorder %s342, %s343
      %p354 = scmp.eq.s32.totalorder %s27, 0
      %p355 = por %p353, %p354
      %p356 = scmp.ne.s32.totalorder %s342, %s343
      %p357 = scmp.eq.s32.totalorder %s28, 1
      %p358 = por %p356, %p357
      %p360 = scmp.ne.s32.totalorder %s343, %s359
      %p361 = scmp.eq.s32.totalorder %s28, 0
      %p362 = por %p360, %p361
      %s364 = sadd.s32 %s363, 1
      %p367 = scmp.eq.s32.totalorder %s22, 1
      %p368 = scmp.ne.s32.totalorder %s363, %s365
      %p369 = scmp.eq.s32.totalorder %s22, 0
      %p370 = por %p368, %p369
      %p371 = scmp.ne.s32.totalorder %s363, %s365
      %p372 = scmp.eq.s32.totalorder %s27, 1
      %p373 = por %p371, %p372
      %p374 = scmp.ne.s32.totalorder %s365, %s366
      %p375 = scmp.eq.s32.totalorder %s27, 0
      %p376 = por %p374, %p375
      %p377 = scmp.ne.s32.totalorder %s365, %s366
      %p378 = scmp.eq.s32.totalorder %s28, 1
      %p379 = por %p377, %p378
      %p381 = scmp.ne.s32.totalorder %s366, %s380
      %p382 = scmp.eq.s32.totalorder %s28, 0
      %p383 = por %p381, %p382
      %s385 = sadd.s32 %s384, 1
      %p388 = scmp.eq.s32.totalorder %s22, 1
      %p389 = scmp.ne.s32.totalorder %s384, %s386
      %p390 = scmp.eq.s32.totalorder %s22, 0
      %p391 = por %p389, %p390
      %p392 = scmp.ne.s32.totalorder %s384, %s386
      %p393 = scmp.eq.s32.totalorder %s27, 1
      %p394 = por %p392, %p393
      %p395 = scmp.ne.s32.totalorder %s386, %s387
      %p396 = scmp.eq.s32.totalorder %s27, 0
      %p397 = por %p395, %p396
      %p398 = scmp.ne.s32.totalorder %s386, %s387
      %p399 = scmp.eq.s32.totalorder %s28, 1
      %p400 = por %p398, %p399
      %p402 = scmp.ne.s32.totalorder %s387, %s401
      %p403 = scmp.eq.s32.totalorder %s28, 0
      %p404 = por %p402, %p403
      %s406 = sadd.s32 %s405, 1
      %p409 = scmp.eq.s32.totalorder %s22, 1
      %p410 = scmp.ne.s32.totalorder %s405, %s407
      %p411 = scmp.eq.s32.totalorder %s22, 0
      %p412 = por %p410, %p411
      %p413 = scmp.ne.s32.totalorder %s405, %s407
      %p414 = scmp.eq.s32.totalorder %s27, 1
      %p415 = por %p413, %p414
      %p416 = scmp.ne.s32.totalorder %s407, %s408
      %p417 = scmp.eq.s32.totalorder %s27, 0
      %p418 = por %p416, %p417
      %p419 = scmp.ne.s32.totalorder %s407, %s408
      %p420 = scmp.eq.s32.totalorder %s28, 1
      %p421 = por %p419, %p420
      %p423 = scmp.ne.s32.totalorder %s408, %s422
      %p424 = scmp.eq.s32.totalorder %s28, 0
      %p425 = por %p423, %p424
      %p426 = scmp.le.s32.totalorder 1, %s22
      %p427 = scmp.lt.s32.totalorder %s22, 3
      %p428 = pnand %p426, %p427
      %p429 = pneg %p428
      // Predicated region
      $region9: #{tpu_custom_call.1} parent=5 // pred_check
        _
      $region10: #{tpu_custom_call.1} parent=5 // pred_check_branch
        %431 = sbr.rel (%p428) target = $region12
      $region11: #{tpu_custom_call.1} parent=5 // pred_region
        %s432 = ssub.s32 %s22, 1
        // Predicated region
        $region13: #{tpu_custom_call.1} parent=11 // pred_check
          %p433 = pneg %p43
        $region14: #{tpu_custom_call.1} parent=11 // pred_check_branch
          %435 = sbr.rel (%p433) target = $region16
        $region15: #{tpu_custom_call.1} parent=11 // pred_region
          _
        $region16: #{tpu_custom_call.1} parent=11 // pred_fallthru
          _
        // Predicated region
        $region17: #{tpu_custom_call.1} parent=11 // pred_check
          %p436 = pneg %p376
        $region18: #{tpu_custom_call.1} parent=11 // pred_check_branch
          %438 = sbr.rel (%p436) target = $region20
        $region19: #{tpu_custom_call.1} parent=11 // pred_region
          _
        $region20: #{tpu_custom_call.1} parent=11 // pred_fallthru
          _
        // Predicated region
        $region21: #{tpu_custom_call.1} parent=11 // pred_check
          %p439 = pneg %p397
        $region22: #{tpu_custom_call.1} parent=11 // pred_check_branch
          %441 = sbr.rel (%p439) target = $region24
        $region23: #{tpu_custom_call.1} parent=11 // pred_region
          _
        $region24: #{tpu_custom_call.1} parent=11 // pred_fallthru
          _
      $region12: #{tpu_custom_call.1} parent=5 // pred_fallthru
        _
      %p442 = scmp.lt.s32.totalorder %s22, 2
      // Predicated region
      $region25: #{tpu_custom_call.1} parent=5 // pred_check
        %p443 = pneg %p442
      $region26: #{tpu_custom_call.1} parent=5 // pred_check_branch
        %445 = sbr.rel (%p443) target = $region28
      $region27: #{tpu_custom_call.1} parent=5 // pred_region
        // Predicated region
        $region29: #{tpu_custom_call.1} parent=27 // pred_check
          %p446 = pneg %p63
        $region30: #{tpu_custom_call.1} parent=27 // pred_check_branch
          %448 = sbr.rel (%p446) target = $region32
        $region31: #{tpu_custom_call.1} parent=27 // pred_region
          %p449 = scmp.lt.s32.totalorder %s22, 1
          %s450 = scalar_select %p449, %s22, 1
          %s451 = smul.addr %s450, 4
          %s452 = smul.addr %s451, 4
          %s453 = scalar_lea.vmem %s1, %s452
        $region32: #{tpu_custom_call.1} parent=27 // pred_fallthru
          _
        // Predicated region
        $region33: #{tpu_custom_call.1} parent=27 // pred_check
          %p454 = pneg %p89
        $region34: #{tpu_custom_call.1} parent=27 // pred_check_branch
          %456 = sbr.rel (%p454) target = $region36
        $region35: #{tpu_custom_call.1} parent=27 // pred_region
          %p457 = scmp.lt.s32.totalorder %s22, 1
          %s458 = scalar_select %p457, %s22, 1
          %s459 = scalar_lea.vmem %s2, %s458
        $region36: #{tpu_custom_call.1} parent=27 // pred_fallthru
          _
        // Predicated region
        $region37: #{tpu_custom_call.1} parent=27 // pred_check
          %p460 = pneg %p115
        $region38: #{tpu_custom_call.1} parent=27 // pred_check_branch
          %462 = sbr.rel (%p460) target = $region40
        $region39: #{tpu_custom_call.1} parent=27 // pred_region
          %p463 = scmp.lt.s32.totalorder %s22, 1
          %s464 = scalar_select %p463, %s22, 1
          %s465 = smul.addr %s464, 4
          %s466 = smul.addr %s465, 4
          %s467 = scalar_lea.vmem %s3, %s466
        $region40: #{tpu_custom_call.1} parent=27 // pred_fallthru
          _
        // Predicated region
        $region41: #{tpu_custom_call.1} parent=27 // pred_check
          %p468 = pneg %p141
        $region42: #{tpu_custom_call.1} parent=27 // pred_check_branch
          %470 = sbr.rel (%p468) target = $region44
        $region43: #{tpu_custom_call.1} parent=27 // pred_region
          %p471 = scmp.lt.s32.totalorder %s22, 1
          %s472 = scalar_select %p471, %s22, 1
          %s473 = scalar_lea.vmem %s4, %s472
        $region44: #{tpu_custom_call.1} parent=27 // pred_fallthru
          _
        // Predicated region
        $region45: #{tpu_custom_call.1} parent=27 // pred_check
          %p474 = pneg %p167
        $region46: #{tpu_custom_call.1} parent=27 // pred_check_branch
          %476 = sbr.rel (%p474) target = $region48
        $region47: #{tpu_custom_call.1} parent=27 // pred_region
          %p477 = scmp.lt.s32.totalorder %s22, 1
          %s478 = scalar_select %p477, %s22, 1
          %s479 = smul.addr %s478, 2
          %s480 = smul.addr %s479, 4
          %s481 = scalar_lea.vmem %s5, %s480
        $region48: #{tpu_custom_call.1} parent=27 // pred_fallthru
          _
        // Predicated region
        $region49: #{tpu_custom_call.1} parent=27 // pred_check
          %p482 = pneg %p193
        $region50: #{tpu_custom_call.1} parent=27 // pred_check_branch
          %484 = sbr.rel (%p482) target = $region52
        $region51: #{tpu_custom_call.1} parent=27 // pred_region
          %p485 = scmp.lt.s32.totalorder %s22, 1
          %s486 = scalar_select %p485, %s22, 1
          %s487 = scalar_lea.vmem %s6, %s486
        $region52: #{tpu_custom_call.1} parent=27 // pred_fallthru
          _
        // Predicated region
        $region53: #{tpu_custom_call.1} parent=27 // pred_check
          %p488 = pneg %p219
        $region54: #{tpu_custom_call.1} parent=27 // pred_check_branch
          %490 = sbr.rel (%p488) target = $region56
        $region55: #{tpu_custom_call.1} parent=27 // pred_region
          %p491 = scmp.lt.s32.totalorder %s22, 1
          %s492 = scalar_select %p491, %s22, 1
          %s493 = smul.addr %s492, 4
          %s494 = smul.addr %s493, 4
          %s495 = scalar_lea.vmem %s7, %s494
        $region56: #{tpu_custom_call.1} parent=27 // pred_fallthru
          _
        // Predicated region
        $region57: #{tpu_custom_call.1} parent=27 // pred_check
          %p496 = pneg %p245
        $region58: #{tpu_custom_call.1} parent=27 // pred_check_branch
          %498 = sbr.rel (%p496) target = $region60
        $region59: #{tpu_custom_call.1} parent=27 // pred_region
          %p499 = scmp.lt.s32.totalorder %s22, 1
          %s500 = scalar_select %p499, %s22, 1
          %s501 = scalar_lea.vmem %s8, %s500
        $region60: #{tpu_custom_call.1} parent=27 // pred_fallthru
          _
        // Predicated region
        $region61: #{tpu_custom_call.1} parent=27 // pred_check
          %p502 = pneg %p271
        $region62: #{tpu_custom_call.1} parent=27 // pred_check_branch
          %504 = sbr.rel (%p502) target = $region64
        $region63: #{tpu_custom_call.1} parent=27 // pred_region
          %p505 = scmp.lt.s32.totalorder %s22, 1
          %s506 = scalar_select %p505, %s22, 1
          %s507 = scalar_lea.vmem %s9, %s506
        $region64: #{tpu_custom_call.1} parent=27 // pred_fallthru
          _
        // Predicated region
        $region65: #{tpu_custom_call.1} parent=27 // pred_check
          %p508 = pneg %p297
        $region66: #{tpu_custom_call.1} parent=27 // pred_check_branch
          %510 = sbr.rel (%p508) target = $region68
        $region67: #{tpu_custom_call.1} parent=27 // pred_region
          %p511 = scmp.lt.s32.totalorder %s22, 1
          %s512 = scalar_select %p511, %s22, 1
          %s513 = scalar_lea.vmem %s10, %s512
        $region68: #{tpu_custom_call.1} parent=27 // pred_fallthru
          _
        // Predicated region
        $region69: #{tpu_custom_call.1} parent=27 // pred_check
          %p514 = pneg %p323
        $region70: #{tpu_custom_call.1} parent=27 // pred_check_branch
          %516 = sbr.rel (%p514) target = $region72
        $region71: #{tpu_custom_call.1} parent=27 // pred_region
          %p517 = scmp.lt.s32.totalorder %s22, 1
          %s518 = scalar_select %p517, %s22, 1
          %s519 = scalar_lea.vmem %s11, %s518
        $region72: #{tpu_custom_call.1} parent=27 // pred_fallthru
          _
        // Predicated region
        $region73: #{tpu_custom_call.1} parent=27 // pred_check
          %p520 = pneg %p349
        $region74: #{tpu_custom_call.1} parent=27 // pred_check_branch
          %522 = sbr.rel (%p520) target = $region76
        $region75: #{tpu_custom_call.1} parent=27 // pred_region
          %p523 = scmp.lt.s32.totalorder %s22, 1
          %s524 = scalar_select %p523, %s22, 1
          %s525 = scalar_lea.vmem %s12, %s524
        $region76: #{tpu_custom_call.1} parent=27 // pred_fallthru
          _
      $region28: #{tpu_custom_call.1} parent=5 // pred_fallthru
        _
      %p526 = scmp.le.s32.totalorder 1, %s22
      %p527 = scmp.lt.s32.totalorder %s22, 3
      %p528 = pnand %p526, %p527
      %p529 = pneg %p528
      // Predicated region
      $region77: #{tpu_custom_call.1} parent=5 // pred_check
        _
      $region78: #{tpu_custom_call.1} parent=5 // pred_check_branch
        %531 = sbr.rel (%p528) target = $region80
      $region79: #{tpu_custom_call.1} parent=5 // pred_region
        %s532 = ssub.s32 %s22, 1
        %p533 = pneg %p43
        %p534 = pneg %p40
        %p535 = scmp.lt.s32.totalorder %s27, 1
        %s536 = scalar_select %p535, %s27, 1
        %s537 = smul.addr %s536, 4
        %s538 = smul.addr %s537, 4
        %s539 = scalar_lea.vmem %s1, %s538
        %p540 = pneg %p69
        %p541 = pneg %p66
        %p542 = scmp.lt.s32.totalorder %s27, 1
        %s543 = scalar_select %p542, %s27, 1
        %s544 = scalar_lea.vmem %s2, %s543
        %p545 = pneg %p95
        %p546 = pneg %p92
        %p547 = scmp.lt.s32.totalorder %s27, 1
        %s548 = scalar_select %p547, %s27, 1
        %s549 = smul.addr %s548, 4
        %s550 = smul.addr %s549, 4
        %s551 = scalar_lea.vmem %s3, %s550
        %p552 = pneg %p121
        %p553 = pneg %p118
        %p554 = scmp.lt.s32.totalorder %s27, 1
        %s555 = scalar_select %p554, %s27, 1
        %s556 = scalar_lea.vmem %s4, %s555
        %p557 = pneg %p147
        %p558 = pneg %p144
        %p559 = scmp.lt.s32.totalorder %s27, 1
        %s560 = scalar_select %p559, %s27, 1
        %s561 = smul.addr %s560, 2
        %s562 = smul.addr %s561, 4
        %s563 = scalar_lea.vmem %s5, %s562
        %p564 = pneg %p173
        %p565 = pneg %p170
        %p566 = scmp.lt.s32.totalorder %s27, 1
        %s567 = scalar_select %p566, %s27, 1
        %s568 = scalar_lea.vmem %s6, %s567
        %p569 = pneg %p199
        %p570 = pneg %p196
        %p571 = scmp.lt.s32.totalorder %s27, 1
        %s572 = scalar_select %p571, %s27, 1
        %s573 = smul.addr %s572, 4
        %s574 = smul.addr %s573, 4
        %s575 = scalar_lea.vmem %s7, %s574
        %p576 = pneg %p225
        %p577 = pneg %p222
        %p578 = scmp.lt.s32.totalorder %s27, 1
        %s579 = scalar_select %p578, %s27, 1
        %s580 = scalar_lea.vmem %s8, %s579
        %p581 = pneg %p251
        %p582 = pneg %p248
        %p583 = scmp.lt.s32.totalorder %s27, 1
        %s584 = scalar_select %p583, %s27, 1
        %s585 = scalar_lea.vmem %s9, %s584
        %p586 = pneg %p277
        %p587 = pneg %p274
        %p588 = scmp.lt.s32.totalorder %s27, 1
        %s589 = scalar_select %p588, %s27, 1
        %s590 = scalar_lea.vmem %s10, %s589
        %p591 = pneg %p303
        %p592 = pneg %p300
        %p593 = scmp.lt.s32.totalorder %s27, 1
        %s594 = scalar_select %p593, %s27, 1
        %s595 = scalar_lea.vmem %s11, %s594
        %p596 = pneg %p329
        %p597 = pneg %p326
        %p598 = scmp.lt.s32.totalorder %s27, 1
        %s599 = scalar_select %p598, %s27, 1
        %s600 = scalar_lea.vmem %s12, %s599
        %p601 = pneg %p355
        %p602 = pneg %p352
        %p603 = pneg %p376
        %p604 = pneg %p373
        %p605 = pneg %p397
        %p606 = pneg %p394
        %p607 = pneg %p418
        %p608 = pneg %p415
        %p609 = scmp.lt.s32.totalorder %s27, 1
        %s610 = scalar_select %p609, %s27, 1
        %s611 = smul.addr %s610, 4
        %s612 = smul.addr %s611, 4
        %s613 = scalar_lea.vmem %s1, %s612
        %p614 = scmp.lt.s32.totalorder %s27, 1
        %s615 = scalar_select %p614, %s27, 1
        %s616 = scalar_lea.vmem %s2, %s615
        %p617 = scmp.lt.s32.totalorder %s27, 1
        %s618 = scalar_select %p617, %s27, 1
        %s619 = smul.addr %s618, 4
        %s620 = smul.addr %s619, 4
        %s621 = scalar_lea.vmem %s3, %s620
        %p622 = scmp.lt.s32.totalorder %s27, 1
        %s623 = scalar_select %p622, %s27, 1
        %s624 = scalar_lea.vmem %s4, %s623
        %p625 = scmp.lt.s32.totalorder %s27, 1
        %s626 = scalar_select %p625, %s27, 1
        %s627 = smul.addr %s626, 2
        %s628 = smul.addr %s627, 4
        %s629 = scalar_lea.vmem %s5, %s628
        %p630 = scmp.lt.s32.totalorder %s27, 1
        %s631 = scalar_select %p630, %s27, 1
        %s632 = scalar_lea.vmem %s6, %s631
        %p633 = scmp.lt.s32.totalorder %s27, 1
        %s634 = scalar_select %p633, %s27, 1
        %s635 = smul.addr %s634, 4
        %s636 = smul.addr %s635, 4
        %s637 = scalar_lea.vmem %s7, %s636
        %p638 = scmp.lt.s32.totalorder %s27, 1
        %s639 = scalar_select %p638, %s27, 1
        %s640 = scalar_lea.vmem %s8, %s639
        %p641 = scmp.lt.s32.totalorder %s27, 1
        %s642 = scalar_select %p641, %s27, 1
        %s643 = scalar_lea.vmem %s9, %s642
        %p644 = scmp.lt.s32.totalorder %s27, 1
        %s645 = scalar_select %p644, %s27, 1
        %s646 = scalar_lea.vmem %s10, %s645
        %p647 = scmp.lt.s32.totalorder %s27, 1
        %s648 = scalar_select %p647, %s27, 1
        %s649 = scalar_lea.vmem %s11, %s648
        %p650 = scmp.lt.s32.totalorder %s27, 1
        %s651 = scalar_select %p650, %s27, 1
        %s652 = scalar_lea.vmem %s12, %s651
        %p654 = scmp.eq.s32.totalorder %s27, 0
        // Predicated region
        $region81: #{tpu_custom_call.1} parent=79 // pred_check
          %p655 = pneg %p654
        $region82: #{tpu_custom_call.1} parent=79 // pred_check_branch
          %657 = sbr.rel (%p655) target = $region84
        $region83: #{tpu_custom_call.1} parent=79 // pred_region
          %v658 = vld [vmem:[%s0] sm:$0x3]
          %vm659 = vcmask 254976
          %660 = vst.msk [vmem:[#allocation2] sm:$0x3] %vm659, %v658
        $region84: #{tpu_custom_call.1} parent=79 // pred_fallthru
          _
        %v661 = vld [vmem:[#allocation2] sm:$0x3]
        %v662 = vld [vmem:[%s613] sm:$0xf]
        %v663 = vld [vmem:[%s613 + $0x4] sm:$0xf]
        %v664 = vld [vmem:[%s613 + $0x8] sm:$0xf]
        %v665 = vld [vmem:[%s613 + $0xc] sm:$0xf]
        %v666 = vpack.c.bf16 %v661, %v661
        %v667 = vld [vmem:[%s616] sm:$0x1]
        %v669 = vlaneseq
        %v670 = vshrl.u32 %v669, 7
        %v671 = vsub.s32 0, %v670
        %v672 = vrot.slane %v667, %v671
        %v678 = vunpack.c.l.b16 %v662
        %v679 = vunpack.c.l.b16 %v663
        %v680 = vunpack.c.l.b16 %v664
        %v681 = vunpack.c.l.b16 %v665
        %v682 = vpack.c.b16 %v679, %v678
        %v683 = vpack.c.b16 %v681, %v680
        %vm684 = vcmask 261120
        %v686 = vsel %vm684, %v666, 0
        %v689 = vsel %vm684, %v682, 0
        %v692 = vsel %vm684, %v683, 0
        %694 = vmatprep.subr.bf16.mxu0 0
        %695 = vmatpush1.bf16.xpose.msra.mxu0 %v689
        %696 = vmatprep.subr.bf16.mxu0 0
        %697 = vmatpush1.bf16.xpose.msra.mxu0 %v692
        %698 = vmatprep.subr.bf16.mxu0 0
        %699 = vmatpush1.bf16.xpose.msra.mxu0 0
        %700 = vmatprep.subr.bf16.mxu0 0
        %701 = vmatpush1.bf16.xpose.msra.mxu0 0
        %702 = vmatprep.subr.bf16.mxu0 0
        %703 = vmatpush1.bf16.xpose.msra.mxu0 0
        %704 = vmatprep.subr.bf16.mxu0 0
        %705 = vmatpush1.bf16.xpose.msra.mxu0 0
        %706 = vmatprep.subr.bf16.mxu0 0
        %707 = vmatpush1.bf16.xpose.msra.mxu0 0
        %708 = vmatprep.subr.bf16.mxu0 0
        %709 = vmatpush1.bf16.xpose.msra.mxu0 0
        %710 = vmatprep.subr.bf16.mxu0 0
        %711 = vmatpush1.bf16.xpose.msra.mxu0 0
        %712 = vmatprep.subr.bf16.mxu0 0
        %713 = vmatpush1.bf16.xpose.msra.mxu0 0
        %714 = vmatprep.subr.bf16.mxu0 0
        %715 = vmatpush1.bf16.xpose.msra.mxu0 0
        %716 = vmatprep.subr.bf16.mxu0 0
        %717 = vmatpush1.bf16.xpose.msra.mxu0 0
        %718 = vmatprep.subr.bf16.mxu0 0
        %719 = vmatpush1.bf16.xpose.msra.mxu0 0
        %720 = vmatprep.subr.bf16.mxu0 0
        %721 = vmatpush1.bf16.xpose.msra.mxu0 0
        %722 = vmatprep.subr.bf16.mxu0 0
        %723 = vmatpush1.bf16.xpose.msra.mxu0 0
        %724 = vmatprep.subr.bf16.mxu0 0
        %725 = vmatpush1.bf16.xpose.msra.mxu0 0
        %726 = vmatprep.mubr.bf16.mxu0 0
        %727 = vmatmul.mubr.bf16.gmra.mrb[0].mxu0 %v686
        %v728 = vpop.f32.mrb[0].mxu0
        %v729 = vadd.f32 %v672, %v728
        %v730 = vpop.f32.mrb[0].mxu0
        %v731 = vpop.f32.mrb[0].mxu0
        %v732 = vpop.f32.mrb[0].mxu0
        %733 = vdwg.mxu0
        %v734 = vld [vmem:[%s621] sm:$0xf]
        %v735 = vld [vmem:[%s621 + $0x4] sm:$0xf]
        %v736 = vld [vmem:[%s621 + $0x8] sm:$0xf]
        %v737 = vld [vmem:[%s621 + $0xc] sm:$0xf]
        %v738 = vpack.c.bf16 %v729, %v729
        %v739 = vld [vmem:[%s624] sm:$0x1]
        %v741 = vlaneseq
        %v742 = vshrl.u32 %v741, 7
        %v743 = vsub.s32 0, %v742
        %v744 = vrot.slane %v739, %v743
        %v750 = vunpack.c.l.b16 %v734
        %v751 = vunpack.c.l.b16 %v735
        %v752 = vunpack.c.l.b16 %v736
        %v753 = vunpack.c.l.b16 %v737
        %v754 = vpack.c.b16 %v751, %v750
        %v755 = vpack.c.b16 %v753, %v752
        %v757 = vsel %vm684, %v738, 0
        %v760 = vsel %vm684, %v754, 0
        %v763 = vsel %vm684, %v755, 0
        %765 = vmatprep.subr.bf16.mxu0 0
        %766 = vmatpush1.bf16.xpose.msra.mxu0 %v760
        %767 = vmatprep.subr.bf16.mxu0 0
        %768 = vmatpush1.bf16.xpose.msra.mxu0 %v763
        %769 = vmatprep.subr.bf16.mxu0 0
        %770 = vmatpush1.bf16.xpose.msra.mxu0 0
        %771 = vmatprep.subr.bf16.mxu0 0
        %772 = vmatpush1.bf16.xpose.msra.mxu0 0
        %773 = vmatprep.subr.bf16.mxu0 0
        %774 = vmatpush1.bf16.xpose.msra.mxu0 0
        %775 = vmatprep.subr.bf16.mxu0 0
        %776 = vmatpush1.bf16.xpose.msra.mxu0 0
        %777 = vmatprep.subr.bf16.mxu0 0
        %778 = vmatpush1.bf16.xpose.msra.mxu0 0
        %779 = vmatprep.subr.bf16.mxu0 0
        %780 = vmatpush1.bf16.xpose.msra.mxu0 0
        %781 = vmatprep.subr.bf16.mxu0 0
        %782 = vmatpush1.bf16.xpose.msra.mxu0 0
        %783 = vmatprep.subr.bf16.mxu0 0
        %784 = vmatpush1.bf16.xpose.msra.mxu0 0
        %785 = vmatprep.subr.bf16.mxu0 0
        %786 = vmatpush1.bf16.xpose.msra.mxu0 0
        %787 = vmatprep.subr.bf16.mxu0 0
        %788 = vmatpush1.bf16.xpose.msra.mxu0 0
        %789 = vmatprep.subr.bf16.mxu0 0
        %790 = vmatpush1.bf16.xpose.msra.mxu0 0
        %791 = vmatprep.subr.bf16.mxu0 0
        %792 = vmatpush1.bf16.xpose.msra.mxu0 0
        %793 = vmatprep.subr.bf16.mxu0 0
        %794 = vmatpush1.bf16.xpose.msra.mxu0 0
        %795 = vmatprep.subr.bf16.mxu0 0
        %796 = vmatpush1.bf16.xpose.msra.mxu0 0
        %797 = vmatprep.mubr.bf16.mxu0 0
        %798 = vmatmul.mubr.bf16.gmra.mrb[0].mxu0 %v757
        %v799 = vpop.f32.mrb[0].mxu0
        %v800 = vadd.f32 %v744, %v799
        %v801 = vpop.f32.mrb[0].mxu0
        %v802 = vpop.f32.mrb[0].mxu0
        %v803 = vpop.f32.mrb[0].mxu0
        %804 = vdwg.mxu0
        %v805 = vadd.f32 %v661, %v800
        %v806 = vld [vmem:[%s643] sm:$0x1]
        %v807 = vld [vmem:[%s646] sm:$0x1]
        %vm808 = vcmask 254976
        %v809 = vsel %vm808, %v805, 0.0
        %810 = vadd.xlane.f32.xlu0 %v809
        %v811 = vpop.xlane.xlu0 %810
        %v812 = vrcp.pop 32.0
        %v813 = vmul.f32 %v811, %v812
        %v814 = vsub.f32 %v805, %v813
        %v815 = vmul.f32 %v814, %v814
        %v816 = vsel %vm808, %v815, 0.0
        %817 = vadd.xlane.f32.xlu0 %v816
        %v818 = vpop.xlane.xlu0 %817
        %v819 = vmul.f32 %v818, %v812
        %v820 = vadd.f32 %v819, 1e-05
        %v821 = vrsqrt.pop %v820
        %v822 = vmul.f32 %v814, %v821
        %v824 = vlaneseq
        %v825 = vshrl.u32 %v824, 7
        %v826 = vsub.s32 0, %v825
        %v827 = vrot.slane %v806, %v826
        %v829 = vmul.f32 %v822, %v827
        %v831 = vlaneseq
        %v832 = vshrl.u32 %v831, 7
        %v833 = vsub.s32 0, %v832
        %v834 = vrot.slane %v807, %v833
        %v836 = vadd.f32 %v829, %v834
        %v837 = vld [vmem:[%s629] sm:$0xf]
        %v838 = vld [vmem:[%s629 + $0x4] sm:$0xf]
        %v839 = vpack.c.bf16 %v836, %v836
        %v840 = vld [vmem:[%s632] sm:$0x1]
        %v842 = vlaneseq
        %v843 = vshrl.u32 %v842, 7
        %v844 = vsub.s32 0, %v843
        %v845 = vrot.slane %v840, %v844
        %v849 = vunpack.c.l.b16 %v837
        %v850 = vunpack.c.l.b16 %v838
        %v851 = vpack.c.b16 %v850, %v849
        %v853 = vsel %vm684, %v839, 0
        %v856 = vsel %vm684, %v851, 0
        %858 = vmatprep.subr.bf16.mxu0 0
        %859 = vmatpush1.bf16.xpose.msra.mxu0 %v856
        %860 = vmatprep.subr.bf16.mxu0 0
        %861 = vmatpush1.bf16.xpose.msra.mxu0 0
        %862 = vmatprep.subr.bf16.mxu0 0
        %863 = vmatpush1.bf16.xpose.msra.mxu0 0
        %864 = vmatprep.subr.bf16.mxu0 0
        %865 = vmatpush1.bf16.xpose.msra.mxu0 0
        %866 = vmatprep.subr.bf16.mxu0 0
        %867 = vmatpush1.bf16.xpose.msra.mxu0 0
        %868 = vmatprep.subr.bf16.mxu0 0
        %869 = vmatpush1.bf16.xpose.msra.mxu0 0
        %870 = vmatprep.subr.bf16.mxu0 0
        %871 = vmatpush1.bf16.xpose.msra.mxu0 0
        %872 = vmatprep.subr.bf16.mxu0 0
        %873 = vmatpush1.bf16.xpose.msra.mxu0 0
        %874 = vmatprep.subr.bf16.mxu0 0
        %875 = vmatpush1.bf16.xpose.msra.mxu0 0
        %876 = vmatprep.subr.bf16.mxu0 0
        %877 = vmatpush1.bf16.xpose.msra.mxu0 0
        %878 = vmatprep.subr.bf16.mxu0 0
        %879 = vmatpush1.bf16.xpose.msra.mxu0 0
        %880 = vmatprep.subr.bf16.mxu0 0
        %881 = vmatpush1.bf16.xpose.msra.mxu0 0
        %882 = vmatprep.subr.bf16.mxu0 0
        %883 = vmatpush1.bf16.xpose.msra.mxu0 0
        %884 = vmatprep.subr.bf16.mxu0 0
        %885 = vmatpush1.bf16.xpose.msra.mxu0 0
        %886 = vmatprep.subr.bf16.mxu0 0
        %887 = vmatpush1.bf16.xpose.msra.mxu0 0
        %888 = vmatprep.subr.bf16.mxu0 0
        %889 = vmatpush1.bf16.xpose.msra.mxu0 0
        %890 = vmatprep.mubr.bf16.mxu0 0
        %891 = vmatmul.mubr.bf16.gmra.mrb[0].mxu0 %v853
        %v892 = vpop.f32.mrb[0].mxu0
        %v893 = vadd.f32 %v845, %v892
        %v894 = vpop.f32.mrb[0].mxu0
        %v895 = vpop.f32.mrb[0].mxu0
        %v896 = vpop.f32.mrb[0].mxu0
        %897 = vdwg.mxu0
        %v898 = vmax.f32 %v893, 0.0
        %v899 = vld [vmem:[%s637] sm:$0xf]
        %v900 = vld [vmem:[%s637 + $0x4] sm:$0xf]
        %v901 = vld [vmem:[%s637 + $0x8] sm:$0xf]
        %v902 = vld [vmem:[%s637 + $0xc] sm:$0xf]
        %v903 = vpack.c.bf16 %v898, %v898
        %v904 = vld [vmem:[%s640] sm:$0x1]
        %v906 = vlaneseq
        %v907 = vshrl.u32 %v906, 7
        %v908 = vsub.s32 0, %v907
        %v909 = vrot.slane %v904, %v908
        %v915 = vunpack.c.l.b16 %v899
        %v916 = vunpack.c.l.b16 %v900
        %v917 = vunpack.c.l.b16 %v901
        %v918 = vunpack.c.l.b16 %v902
        %v919 = vpack.c.b16 %v916, %v915
        %v920 = vpack.c.b16 %v918, %v917
        %vm921 = vcmask 130048
        %v923 = vsel %vm921, %v903, 0
        %v926 = vsel %vm921, %v919, 0
        %v929 = vsel %vm921, %v920, 0
        %931 = vmatprep.subr.bf16.mxu0 0
        %932 = vmatpush1.bf16.xpose.msra.mxu0 %v926
        %933 = vmatprep.subr.bf16.mxu0 0
        %934 = vmatpush1.bf16.xpose.msra.mxu0 %v929
        %935 = vmatprep.subr.bf16.mxu0 0
        %936 = vmatpush1.bf16.xpose.msra.mxu0 0
        %937 = vmatprep.subr.bf16.mxu0 0
        %938 = vmatpush1.bf16.xpose.msra.mxu0 0
        %939 = vmatprep.subr.bf16.mxu0 0
        %940 = vmatpush1.bf16.xpose.msra.mxu0 0
        %941 = vmatprep.subr.bf16.mxu0 0
        %942 = vmatpush1.bf16.xpose.msra.mxu0 0
        %943 = vmatprep.subr.bf16.mxu0 0
        %944 = vmatpush1.bf16.xpose.msra.mxu0 0
        %945 = vmatprep.subr.bf16.mxu0 0
        %946 = vmatpush1.bf16.xpose.msra.mxu0 0
        %947 = vmatprep.subr.bf16.mxu0 0
        %948 = vmatpush1.bf16.xpose.msra.mxu0 0
        %949 = vmatprep.subr.bf16.mxu0 0
        %950 = vmatpush1.bf16.xpose.msra.mxu0 0
        %951 = vmatprep.subr.bf16.mxu0 0
        %952 = vmatpush1.bf16.xpose.msra.mxu0 0
        %953 = vmatprep.subr.bf16.mxu0 0
        %954 = vmatpush1.bf16.xpose.msra.mxu0 0
        %955 = vmatprep.subr.bf16.mxu0 0
        %956 = vmatpush1.bf16.xpose.msra.mxu0 0
        %957 = vmatprep.subr.bf16.mxu0 0
        %958 = vmatpush1.bf16.xpose.msra.mxu0 0
        %959 = vmatprep.subr.bf16.mxu0 0
        %960 = vmatpush1.bf16.xpose.msra.mxu0 0
        %961 = vmatprep.subr.bf16.mxu0 0
        %962 = vmatpush1.bf16.xpose.msra.mxu0 0
        %963 = vmatprep.mubr.bf16.mxu0 0
        %964 = vmatmul.mubr.bf16.gmra.mrb[0].mxu0 %v923
        %v965 = vpop.f32.mrb[0].mxu0
        %v966 = vadd.f32 %v909, %v965
        %v967 = vpop.f32.mrb[0].mxu0
        %v968 = vpop.f32.mrb[0].mxu0
        %v969 = vpop.f32.mrb[0].mxu0
        %970 = vdwg.mxu0
        %v971 = vadd.f32 %v836, %v966
        %v972 = vld [vmem:[%s649] sm:$0x1]
        %v973 = vld [vmem:[%s652] sm:$0x1]
        %v974 = vsel %vm808, %v971, 0.0
        %975 = vadd.xlane.f32.xlu0 %v974
        %v976 = vpop.xlane.xlu0 %975
        %v977 = vmul.f32 %v976, %v812
        %v978 = vsub.f32 %v971, %v977
        %v979 = vmul.f32 %v978, %v978
        %v980 = vsel %vm808, %v979, 0.0
        %981 = vadd.xlane.f32.xlu0 %v980
        %v982 = vpop.xlane.xlu0 %981
        %v983 = vmul.f32 %v982, %v812
        %v984 = vadd.f32 %v983, 1e-05
        %v985 = vrsqrt.pop %v984
        %v986 = vmul.f32 %v978, %v985
        %v988 = vlaneseq
        %v989 = vshrl.u32 %v988, 7
        %v990 = vsub.s32 0, %v989
        %v991 = vrot.slane %v972, %v990
        %v993 = vmul.f32 %v986, %v991
        %v995 = vlaneseq
        %v996 = vshrl.u32 %v995, 7
        %v997 = vsub.s32 0, %v996
        %v998 = vrot.slane %v973, %v997
        %v1000 = vadd.f32 %v993, %v998
        %1001 = vst.msk [vmem:[#allocation2] sm:$0x3] %vm808, %v1000
        %p1002 = scmp.eq.s32.totalorder %s27, 1
        // Predicated region
        $region85: #{tpu_custom_call.1} parent=79 // pred_check
          %p1003 = pneg %p1002
        $region86: #{tpu_custom_call.1} parent=79 // pred_check_branch
          %1005 = sbr.rel (%p1003) target = $region88
        $region87: #{tpu_custom_call.1} parent=79 // pred_region
          %v1006 = vld [vmem:[%s13] sm:$0xf]
          %v1007 = vld [vmem:[%s13 + $0x4] sm:$0xf]
          %v1008 = vld [vmem:[%s13 + $0x8] sm:$0xf]
          %v1009 = vld [vmem:[%s13 + $0xc] sm:$0xf]
          %v1010 = vld [vmem:[%s13 + $0x10] sm:$0xf]
          %v1011 = vld [vmem:[%s13 + $0x14] sm:$0xf]
          %v1012 = vld [vmem:[%s13 + $0x18] sm:$0xf]
          %v1013 = vld [vmem:[%s13 + $0x1c] sm:$0xf]
          %v1014 = vld [vmem:[%s13 + $0x20] sm:$0xf]
          %v1015 = vld [vmem:[%s13 + $0x24] sm:$0xf]
          %v1016 = vld [vmem:[%s13 + $0x28] sm:$0xf]
          %v1017 = vld [vmem:[%s13 + $0x2c] sm:$0xf]
          %v1018 = vld [vmem:[%s13 + $0x30] sm:$0xf]
          %v1019 = vld [vmem:[%s13 + $0x34] sm:$0xf]
          %v1020 = vld [vmem:[%s13 + $0x38] sm:$0xf]
          %v1021 = vld [vmem:[%s13 + $0x3c] sm:$0xf]
          %v1022 = vpack.c.bf16 %v1000, %v1000
          %v1023 = vld [vmem:[%s14] sm:$0x1]
          %v1025 = vlaneseq
          %v1026 = vshrl.u32 %v1025, 7
          %v1027 = vsub.s32 0, %v1026
          %v1028 = vrot.slane %v1023, %v1027
          %v1046 = vunpack.c.l.b16 %v1006
          %v1047 = vunpack.c.l.b16 %v1007
          %v1048 = vunpack.c.l.b16 %v1008
          %v1049 = vunpack.c.l.b16 %v1009
          %v1050 = vunpack.c.l.b16 %v1010
          %v1051 = vunpack.c.l.b16 %v1011
          %v1052 = vunpack.c.l.b16 %v1012
          %v1053 = vunpack.c.l.b16 %v1013
          %v1054 = vunpack.c.l.b16 %v1014
          %v1055 = vunpack.c.l.b16 %v1015
          %v1056 = vunpack.c.l.b16 %v1016
          %v1057 = vunpack.c.l.b16 %v1017
          %v1058 = vunpack.c.l.b16 %v1018
          %v1059 = vunpack.c.l.b16 %v1019
          %v1060 = vunpack.c.l.b16 %v1020
          %v1061 = vunpack.c.l.b16 %v1021
          %v1062 = vpack.c.b16 %v1047, %v1046
          %v1063 = vpack.c.b16 %v1049, %v1048
          %v1064 = vpack.c.b16 %v1051, %v1050
          %v1065 = vpack.c.b16 %v1053, %v1052
          %v1066 = vpack.c.b16 %v1055, %v1054
          %v1067 = vpack.c.b16 %v1057, %v1056
          %v1068 = vpack.c.b16 %v1059, %v1058
          %v1069 = vpack.c.b16 %v1061, %v1060
          %v1071 = vsel %vm684, %v1022, 0
          %v1074 = vsel %vm684, %v1062, 0
          %v1077 = vsel %vm684, %v1063, 0
          %v1080 = vsel %vm684, %v1064, 0
          %v1083 = vsel %vm684, %v1065, 0
          %v1086 = vsel %vm684, %v1066, 0
          %v1089 = vsel %vm684, %v1067, 0
          %v1092 = vsel %vm684, %v1068, 0
          %v1095 = vsel %vm684, %v1069, 0
          %1097 = vmatprep.subr.bf16.mxu0 0
          %1098 = vmatpush1.bf16.xpose.msra.mxu0 %v1074
          %1099 = vmatprep.subr.bf16.mxu0 0
          %1100 = vmatpush1.bf16.xpose.msra.mxu0 %v1077
          %1101 = vmatprep.subr.bf16.mxu0 0
          %1102 = vmatpush1.bf16.xpose.msra.mxu0 %v1080
          %1103 = vmatprep.subr.bf16.mxu0 0
          %1104 = vmatpush1.bf16.xpose.msra.mxu0 %v1083
          %1105 = vmatprep.subr.bf16.mxu0 0
          %1106 = vmatpush1.bf16.xpose.msra.mxu0 %v1086
          %1107 = vmatprep.subr.bf16.mxu0 0
          %1108 = vmatpush1.bf16.xpose.msra.mxu0 %v1089
          %1109 = vmatprep.subr.bf16.mxu0 0
          %1110 = vmatpush1.bf16.xpose.msra.mxu0 %v1092
          %1111 = vmatprep.subr.bf16.mxu0 0
          %1112 = vmatpush1.bf16.xpose.msra.mxu0 %v1095
          %1113 = vmatprep.subr.bf16.mxu0 0
          %1114 = vmatpush1.bf16.xpose.msra.mxu0 0
          %1115 = vmatprep.subr.bf16.mxu0 0
          %1116 = vmatpush1.bf16.xpose.msra.mxu0 0
          %1117 = vmatprep.subr.bf16.mxu0 0
          %1118 = vmatpush1.bf16.xpose.msra.mxu0 0
          %1119 = vmatprep.subr.bf16.mxu0 0
          %1120 = vmatpush1.bf16.xpose.msra.mxu0 0
          %1121 = vmatprep.subr.bf16.mxu0 0
          %1122 = vmatpush1.bf16.xpose.msra.mxu0 0
          %1123 = vmatprep.subr.bf16.mxu0 0
          %1124 = vmatpush1.bf16.xpose.msra.mxu0 0
          %1125 = vmatprep.subr.bf16.mxu0 0
          %1126 = vmatpush1.bf16.xpose.msra.mxu0 0
          %1127 = vmatprep.subr.bf16.mxu0 0
          %1128 = vmatpush1.bf16.xpose.msra.mxu0 0
          %1129 = vmatprep.mubr.bf16.mxu0 0
          %1130 = vmatmul.mubr.bf16.gmra.mrb[0].mxu0 %v1071
          %v1131 = vpop.f32.mrb[0].mxu0
          %v1132 = vadd.f32 %v1028, %v1131
          %v1133 = vpop.f32.mrb[0].mxu0
          %v1134 = vpop.f32.mrb[0].mxu0
          %v1135 = vpop.f32.mrb[0].mxu0
          %1136 = vdwg.mxu0
          %1137 = vst [vmem:[#allocation3] sm:$0x3] %v1132
        $region88: #{tpu_custom_call.1} parent=79 // pred_fallthru
          _
        // Predicated region
        $region89: #{tpu_custom_call.1} parent=79 // pred_check
          %p1138 = pneg %p415
        $region90: #{tpu_custom_call.1} parent=79 // pred_check_branch
          %1140 = sbr.rel (%p1138) target = $region92
        $region91: #{tpu_custom_call.1} parent=79 // pred_region
          %s1142 = ssub.s32 32, 32
          %1143 = vsyncadd [#allocation4], %s1142
          %s1145 = sshll.u32 [#allocation3], 4
          %s1146 = int_to_ptr.vmem [resolvable:$true] %s1145
          %1148 = dma.vmem_to_hbm [thread:$0]  %s1146, 32, %s15, [#allocation4]
        $region92: #{tpu_custom_call.1} parent=79 // pred_fallthru
          _
        // Predicated region
        $region93: #{tpu_custom_call.1} parent=79 // pred_check
          %p1149 = pneg %p415
        $region94: #{tpu_custom_call.1} parent=79 // pred_check_branch
          %1151 = sbr.rel (%p1149) target = $region96
        $region95: #{tpu_custom_call.1} parent=79 // pred_region
          %1152 = dma.done [#allocation4], 32
        $region96: #{tpu_custom_call.1} parent=79 // pred_fallthru
          _
      $region80: #{tpu_custom_call.1} parent=5 // pred_fallthru
        _
      %p1153 = scmp.le.s32.totalorder 2, %s22
      // Predicated region
      $region97: #{tpu_custom_call.1} parent=5 // pred_check
        %p1154 = pneg %p1153
      $region98: #{tpu_custom_call.1} parent=5 // pred_check_branch
        %1156 = sbr.rel (%p1154) target = $region100
      $region99: #{tpu_custom_call.1} parent=5 // pred_region
        %s1157 = ssub.s32 %s22, 2
      $region100: #{tpu_custom_call.1} parent=5 // pred_fallthru
        _
    $region6: #{tpu_custom_call.1} parent=1 // loop_footer
      %s26 = sadd.s32 1, %s22
    $region7: #{tpu_custom_call.1} parent=1 // loop_footer_branch
      %21 = sbr.rel target = $region3
    $region8: #{tpu_custom_call.1} parent=1 // loop_exit
      _
    %1158 = vsyncpa [#allocation4], 1
    %s1159 = scalar_lea.sflag [#allocation4], 1
    %1160 = vsyncpa %s1159, 1

</llo_original>
